<compile_context>
chip_gen: v7x
topology: tpu7x:2x2x1
jax: 0.10.0
libtpu: 0.0.40
codegen_flags: <defaults>
</compile_context>

<pallas_src>
import math

import jax
import jax.numpy as jnp
from jax.experimental import pallas as pl

# model config (small, consistent with BertAttention's shape requirements)
BATCH = 2
SEQ = 8
HIDDEN = 32
NUM_HEADS = 4
HEAD_DIM = HIDDEN // NUM_HEADS
ROWS = BATCH * SEQ            # 16 token rows processed in one shot
FUSED = 4 * HIDDEN            # Q | K | V | residual-projection -> 128 lanes
LN_EPS = 1e-12
NEG_INF = -1e30

assert SEQ & (SEQ - 1) == 0, "SEQ must be a power of two (shift-based batch ids)"
LOG2_SEQ = SEQ.bit_length() - 1


def bert_attention_kernel(x_ref, w_ref, b_ref, gamma_ref, beta_ref, out_ref):
    x = x_ref[...]                                                     # (16, 32) f32

    # One lane-dense (16, 128) MXU matmul: Q | K | V | residual projection.
    # 1/sqrt(head_dim) is already folded into the Q columns of w/b.
    slab = jnp.dot(x, w_ref[...], preferred_element_type=jnp.float32) + b_ref[...]
    q = slab[:, 0 * HIDDEN:1 * HIDDEN]
    k = slab[:, 1 * HIDDEN:2 * HIDDEN]
    v = slab[:, 2 * HIDDEN:3 * HIDDEN]
    res = slab[:, 3 * HIDDEN:4 * HIDDEN]

    # Head-major layout: (ROWS, NH, HD) -> (NH, ROWS, HD). One relayout per
    # operand; heads are then a plain leading batch dim for dot_general.
    qh = jnp.transpose(q.reshape(ROWS, NUM_HEADS, HEAD_DIM), (1, 0, 2))
    kh = jnp.transpose(k.reshape(ROWS, NUM_HEADS, HEAD_DIM), (1, 0, 2))
    vh = jnp.transpose(v.reshape(ROWS, NUM_HEADS, HEAD_DIM), (1, 0, 2))

    # scores[n, i, j] = <q_i, k_j> for every token-row pair in the 16-row slab.
    scores = jax.lax.dot_general(
        qh, kh, (((2,), (2,)), ((0,), (0,))),
        preferred_element_type=jnp.float32)                            # (NH, 16, 16)

    # Rows from different batch elements must not attend to each other:
    # additive -inf-style bias on cross-batch pairs (same role as attention_mask).
    row_b = jax.lax.broadcasted_iota(jnp.int32, (ROWS, ROWS), 0) >> LOG2_SEQ
    col_b = jax.lax.broadcasted_iota(jnp.int32, (ROWS, ROWS), 1) >> LOG2_SEQ
    bias = jnp.where(row_b == col_b, 0.0, NEG_INF)                     # (16, 16)
    scores = scores + bias[None, :, :]

    # softmax over the key axis (exact f32).
    scores = scores - jnp.max(scores, axis=-1, keepdims=True)
    e = jnp.exp(scores)
    probs = e / jnp.sum(e, axis=-1, keepdims=True)
    # TODO(synk): attention dropout skipped (inference / identity).

    # context: (NH, 16, 16) x (NH, 16, HD) -> (NH, 16, HD), then back to rows.
    ctx = jax.lax.dot_general(
        probs, vh, (((2,), (1,)), ((0,), (0,))),
        preferred_element_type=jnp.float32)
    ctx = jnp.transpose(ctx, (1, 0, 2)).reshape(ROWS, HIDDEN)          # (16, 32)

    # residual projection (bias-free) add, relu, layer norm.
    y = jax.nn.relu(ctx + res)
    mean = jnp.mean(y, axis=-1, keepdims=True)
    var = jnp.mean((y - mean) ** 2, axis=-1, keepdims=True)
    yn = (y - mean) * jax.lax.rsqrt(var + LN_EPS)
    out_ref[...] = (yn * gamma_ref[...] + beta_ref[...]).astype(out_ref.dtype)


def bert_layer_forward(x, fused):
    """x: [B, S, H] float32. fused: dict from fuse_params. Returns [B, S, H]."""
    B, S, H = x.shape
    assert (B, S, H) == (BATCH, SEQ, HIDDEN)
    x2d = x.reshape(ROWS, H)     # free wrapper-side reshape to the row slab

    out2d = pl.pallas_call(
        bert_attention_kernel,
        out_shape=jax.ShapeDtypeStruct((ROWS, H), jnp.float32),
        in_specs=[
            pl.BlockSpec((ROWS, H), lambda: (0, 0)),       # token rows
            pl.BlockSpec((H, FUSED), lambda: (0, 0)),      # fused Wq|Wk|Wv|Wp
            pl.BlockSpec((1, FUSED), lambda: (0, 0)),      # fused bq|bk|bv|0
            pl.BlockSpec((1, H), lambda: (0, 0)),          # LN gamma
            pl.BlockSpec((1, H), lambda: (0, 0)),          # LN beta
        ],
        out_specs=pl.BlockSpec((ROWS, H), lambda: (0, 0)),
    )(x2d, fused["w"], fused["b"], fused["gamma"], fused["beta"])
    return out2d.reshape(B, S, H)


def fuse_params(p):
    """One-time fusion: concat Q|K|V|proj weights, fold 1/sqrt(head_dim) into Q."""
    scale = 1.0 / math.sqrt(HEAD_DIM)
    w = jnp.concatenate([p["wq"] * scale, p["wk"], p["wv"], p["wp"]], axis=1)   # (H, 4H)
    b = jnp.concatenate([p["bq"] * scale, p["bk"], p["bv"],
                         jnp.zeros((1, HIDDEN), jnp.float32)], axis=1)          # (1, 4H)
    return {"w": w, "b": b, "gamma": p["gamma"], "beta": p["beta"]}


def reference_forward(x, p):
    """Pure-JAX reference mirroring BertAttention.forward (eval mode)."""
    B, S, H = x.shape
    q = x @ p["wq"] + p["bq"]
    k = x @ p["wk"] + p["bk"]
    v = x @ p["wv"] + p["bv"]

    def split(t):  # (B,S,H) -> (B,NH,S,HD)
        return t.reshape(B, S, NUM_HEADS, HEAD_DIM).transpose(0, 2, 1, 3)

    qh, kh, vh = split(q), split(k), split(v)
    scores = jnp.einsum('bnqd,bnkd->bnqk', qh, kh) / math.sqrt(HEAD_DIM)
    probs = jax.nn.softmax(scores, axis=-1)
    ctx = jnp.einsum('bnqk,bnkd->bnqd', probs, vh)
    ctx = ctx.transpose(0, 2, 1, 3).reshape(B, S, H)
    y = jax.nn.relu(ctx + x @ p["wp"])
    mean = jnp.mean(y, axis=-1, keepdims=True)
    var = jnp.mean((y - mean) ** 2, axis=-1, keepdims=True)
    return (y - mean) / jnp.sqrt(var + LN_EPS) * p["gamma"] + p["beta"]


def init_params(key):
    ks = jax.random.split(key, 8)
    scale = 1.0 / math.sqrt(HIDDEN)
    return {
        "wq": jax.random.normal(ks[0], (HIDDEN, HIDDEN), jnp.float32) * scale,
        "bq": jax.random.normal(ks[1], (1, HIDDEN), jnp.float32) * 0.02,
        "wk": jax.random.normal(ks[2], (HIDDEN, HIDDEN), jnp.float32) * scale,
        "bk": jax.random.normal(ks[3], (1, HIDDEN), jnp.float32) * 0.02,
        "wv": jax.random.normal(ks[4], (HIDDEN, HIDDEN), jnp.float32) * scale,
        "bv": jax.random.normal(ks[5], (1, HIDDEN), jnp.float32) * 0.02,
        "wp": jax.random.normal(ks[6], (HIDDEN, HIDDEN), jnp.float32) * scale,
        "gamma": jnp.ones((1, HIDDEN), jnp.float32),
        "beta": jnp.zeros((1, HIDDEN), jnp.float32),
    }


if __name__ == "__main__":
    key = jax.random.PRNGKey(0)
    k_x, k_p = jax.random.split(key)
    x = jax.random.normal(k_x, (BATCH, SEQ, HIDDEN), jnp.float32)
    params = init_params(k_p)
    fused = fuse_params(params)     # one-time weight fusion + scale fold

    out = bert_layer_forward(x, fused)
    out = jax.block_until_ready(out)

    ref = reference_forward(x, params)
    assert out.shape == (BATCH, SEQ, HIDDEN)
    assert jnp.allclose(out, ref, atol=1e-4, rtol=1e-4), "mismatch vs reference"
    print("KERNEL_OK")
</pallas_src>

<mosaic_0001>
module attributes {stable_mosaic.version = 11 : i64} {
  func.func @bert_attention_kernel(%arg0: memref<16x32xf32, #tpu.memory_space<vmem>>, %arg1: memref<32x128xf32, #tpu.memory_space<vmem>>, %arg2: memref<1x128xf32, #tpu.memory_space<vmem>>, %arg3: memref<1x32xf32, #tpu.memory_space<vmem>>, %arg4: memref<1x32xf32, #tpu.memory_space<vmem>>, %arg5: memref<16x32xf32, #tpu.memory_space<vmem>>) attributes {dimension_semantics = [], scalar_prefetch = 0 : i64, scratch_operands = 0 : i64, tpu.core_type = #tpu.core_type<tc>} {
    %c0 = arith.constant 0 : index
    %c0_0 = arith.constant 0 : index
    %0 = vector.load %arg0[%c0, %c0_0] : memref<16x32xf32, #tpu.memory_space<vmem>>, vector<16x32xf32>
    %c0_1 = arith.constant 0 : index
    %c0_2 = arith.constant 0 : index
    %1 = vector.load %arg1[%c0_1, %c0_2] : memref<32x128xf32, #tpu.memory_space<vmem>>, vector<32x128xf32>
    %cst = arith.constant dense<0.000000e+00> : vector<16x128xf32>
    %2 = tpu.matmul %0, %1, %cst {dimension_numbers = #tpu.dot_dimension_numbers<[1], [0], [0], [1], [0, 0, 1, 1], [], []>} : vector<16x32xf32>, vector<32x128xf32>, vector<16x128xf32> -> vector<16x128xf32>
    %c0_3 = arith.constant 0 : index
    %c0_4 = arith.constant 0 : index
    %3 = vector.load %arg2[%c0_3, %c0_4] : memref<1x128xf32, #tpu.memory_space<vmem>>, vector<1x128xf32>
    %4 = vector.broadcast %3 : vector<1x128xf32> to vector<16x128xf32>
    %5 = arith.addf %2, %4 : vector<16x128xf32>
    %6 = vector.extract_strided_slice %5 {offsets = [0, 0], sizes = [16, 32], strides = [1, 1]} : vector<16x128xf32> to vector<16x32xf32>
    %7 = vector.extract_strided_slice %5 {offsets = [0, 32], sizes = [16, 32], strides = [1, 1]} : vector<16x128xf32> to vector<16x32xf32>
    %8 = vector.extract_strided_slice %5 {offsets = [0, 64], sizes = [16, 32], strides = [1, 1]} : vector<16x128xf32> to vector<16x32xf32>
    %9 = vector.extract_strided_slice %5 {offsets = [0, 96], sizes = [16, 32], strides = [1, 1]} : vector<16x128xf32> to vector<16x32xf32>
    %10 = vector.shape_cast %6 : vector<16x32xf32> to vector<16x4x8xf32>
    %11 = tpu.transpose %10, [1, 0, 2] : vector<16x4x8xf32> -> vector<4x16x8xf32>
    %12 = vector.shape_cast %7 : vector<16x32xf32> to vector<16x4x8xf32>
    %13 = tpu.transpose %12, [1, 0, 2] : vector<16x4x8xf32> -> vector<4x16x8xf32>
    %14 = vector.shape_cast %8 : vector<16x32xf32> to vector<16x4x8xf32>
    %15 = tpu.transpose %14, [1, 0, 2] : vector<16x4x8xf32> -> vector<4x16x8xf32>
    %cst_5 = arith.constant dense<0.000000e+00> : vector<4x16x16xf32>
    %16 = tpu.matmul %11, %13, %cst_5 {dimension_numbers = #tpu.dot_dimension_numbers<[2], [2], [1], [1], [0, 0, 0, 1, 1, 1], [0], [0]>} : vector<4x16x8xf32>, vector<4x16x8xf32>, vector<4x16x16xf32> -> vector<4x16x16xf32>
    %17 = tpu.iota {dimensions = array<i32: 0>} : vector<16x16xi32>
    %c3_i32 = arith.constant 3 : i32
    %18 = vector.broadcast %c3_i32 : i32 to vector<16x16xi32>
    %19 = arith.shrsi %17, %18 : vector<16x16xi32>
    %20 = tpu.iota {dimensions = array<i32: 1>} : vector<16x16xi32>
    %c3_i32_6 = arith.constant 3 : i32
    %21 = vector.broadcast %c3_i32_6 : i32 to vector<16x16xi32>
    %22 = arith.shrsi %20, %21 : vector<16x16xi32>
    %23 = arith.cmpi eq, %19, %22 : vector<16x16xi32>
    %cst_7 = arith.constant 0.000000e+00 : f32
    %cst_8 = arith.constant -1.000000e+30 : f32
    %24 = vector.broadcast %cst_7 : f32 to vector<16x16xf32>
    %25 = vector.broadcast %cst_8 : f32 to vector<16x16xf32>
    %26 = arith.select %23, %24, %25 : vector<16x16xi1>, vector<16x16xf32>
    %27 = vector.shape_cast %26 : vector<16x16xf32> to vector<1x16x16xf32>
    %28 = vector.broadcast %27 : vector<1x16x16xf32> to vector<4x16x16xf32>
    %29 = arith.addf %16, %28 : vector<4x16x16xf32>
    %cst_9 = arith.constant dense<0xFF800000> : vector<4x16xf32>
    %30 = vector.multi_reduction <maximumf>, %29, %cst_9 [2] : vector<4x16x16xf32> to vector<4x16xf32>
    %31 = vector.shape_cast %30 : vector<4x16xf32> to vector<4x16x1xf32>
    %32 = vector.broadcast %31 : vector<4x16x1xf32> to vector<4x16x16xf32>
    %33 = arith.subf %29, %32 : vector<4x16x16xf32>
    %34 = math.exp %33 : vector<4x16x16xf32>
    %cst_10 = arith.constant dense<0.000000e+00> : vector<4x16xf32>
    %35 = vector.multi_reduction <add>, %34, %cst_10 [2] : vector<4x16x16xf32> to vector<4x16xf32>
    %36 = vector.shape_cast %35 : vector<4x16xf32> to vector<4x16x1xf32>
    %37 = vector.broadcast %36 : vector<4x16x1xf32> to vector<4x16x16xf32>
    %38 = arith.divf %34, %37 : vector<4x16x16xf32>
    %cst_11 = arith.constant dense<0.000000e+00> : vector<4x16x8xf32>
    %39 = tpu.matmul %38, %15, %cst_11 {dimension_numbers = #tpu.dot_dimension_numbers<[2], [1], [1], [2], [0, 0, 0, 1, 1, 2], [0], [0]>} : vector<4x16x16xf32>, vector<4x16x8xf32>, vector<4x16x8xf32> -> vector<4x16x8xf32>
    %40 = tpu.transpose %39, [1, 0, 2] : vector<4x16x8xf32> -> vector<16x4x8xf32>
    %41 = vector.shape_cast %40 : vector<16x4x8xf32> to vector<16x32xf32>
    %42 = arith.addf %41, %9 : vector<16x32xf32>
    %cst_12 = arith.constant 0.000000e+00 : f32
    %43 = vector.broadcast %cst_12 : f32 to vector<16x32xf32>
    %44 = arith.maximumf %42, %43 : vector<16x32xf32>
    %cst_13 = arith.constant dense<0.000000e+00> : vector<16xf32>
    %45 = vector.multi_reduction <add>, %44, %cst_13 [1] : vector<16x32xf32> to vector<16xf32>
    %46 = vector.shape_cast %45 : vector<16xf32> to vector<16x1xf32>
    %cst_14 = arith.constant 3.200000e+01 : f32
    %47 = vector.broadcast %cst_14 : f32 to vector<16x1xf32>
    %48 = arith.divf %46, %47 : vector<16x1xf32>
    %49 = vector.broadcast %48 : vector<16x1xf32> to vector<16x32xf32>
    %50 = arith.subf %44, %49 : vector<16x32xf32>
    %51 = arith.mulf %50, %50 : vector<16x32xf32>
    %cst_15 = arith.constant dense<0.000000e+00> : vector<16xf32>
    %52 = vector.multi_reduction <add>, %51, %cst_15 [1] : vector<16x32xf32> to vector<16xf32>
    %53 = vector.shape_cast %52 : vector<16xf32> to vector<16x1xf32>
    %cst_16 = arith.constant 3.200000e+01 : f32
    %54 = vector.broadcast %cst_16 : f32 to vector<16x1xf32>
    %55 = arith.divf %53, %54 : vector<16x1xf32>
    %56 = vector.broadcast %48 : vector<16x1xf32> to vector<16x32xf32>
    %57 = arith.subf %44, %56 : vector<16x32xf32>
    %cst_17 = arith.constant 9.99999996E-13 : f32
    %58 = vector.broadcast %cst_17 : f32 to vector<16x1xf32>
    %59 = arith.addf %55, %58 : vector<16x1xf32>
    %60 = math.rsqrt %59 : vector<16x1xf32>
    %61 = vector.broadcast %60 : vector<16x1xf32> to vector<16x32xf32>
    %62 = arith.mulf %57, %61 : vector<16x32xf32>
    %c0_18 = arith.constant 0 : index
    %c0_19 = arith.constant 0 : index
    %63 = vector.load %arg3[%c0_18, %c0_19] : memref<1x32xf32, #tpu.memory_space<vmem>>, vector<1x32xf32>
    %64 = vector.broadcast %63 : vector<1x32xf32> to vector<16x32xf32>
    %65 = arith.mulf %62, %64 : vector<16x32xf32>
    %c0_20 = arith.constant 0 : index
    %c0_21 = arith.constant 0 : index
    %66 = vector.load %arg4[%c0_20, %c0_21] : memref<1x32xf32, #tpu.memory_space<vmem>>, vector<1x32xf32>
    %67 = vector.broadcast %66 : vector<1x32xf32> to vector<16x32xf32>
    %68 = arith.addf %65, %67 : vector<16x32xf32>
    %c0_22 = arith.constant 0 : index
    %c0_23 = arith.constant 0 : index
    %69 = vector.load %arg5[%c0_22, %c0_23] : memref<16x32xf32, #tpu.memory_space<vmem>>, vector<16x32xf32>
    tpu.vector_store %arg5[%c0_22, %c0_23], %68 {strides = array<i32>} : memref<16x32xf32, #tpu.memory_space<vmem>>, vector<16x32xf32>,
    return
  }
}

</mosaic_0001>

<llo_original>
// kernel: tpu_custom_call.1
$region0: #{tpu_custom_call.1}
  #allocation0 [shape = 'u32[]', space=smem, size = 0x4, offset = 0x4, fixed_abs, tag = 'smem constant byte address 0x4 - core index']
  #allocation1 [shape = 'u32[144,128]{1,0:T(1,128)}', space=vmem, size = 0x12000, scoped, tag = 'internal scratch']
  %s0 = inlined_call_operand.hbm [shape: f32[16,32], index: 0, kind: input, shape index: {}]
  %s1 = inlined_call_operand.hbm [shape: f32[32,128], index: 1, kind: input, shape index: {}]
  %s2 = inlined_call_operand.vmem [shape: f32[1,128], index: 2, kind: input, shape index: {}]
  %s3 = inlined_call_operand.vmem [shape: f32[1,32], index: 3, kind: input, shape index: {}]
  %s4 = inlined_call_operand.vmem [shape: f32[1,32], index: 4, kind: input, shape index: {}]
  %s5 = inlined_call_operand.hbm [shape: f32[16,32], index: 5, kind: output, shape index: {}]
  %s6 = sld [smem:[#allocation0]]
  $region38: #{tpu_custom_call.1} parent=0
    _
  %s8 = ssub.s32 1, %s6
  %s9 = scalar_select 0, %s8, %s6
  $region1: #{tpu_custom_call.1} parent=0
    #allocation2 [shape = 'u8[8192]{0}', space=vmem, size = 0x2000, scoped, tag = 'input window, operand 0, single buffered']
    #allocation3 [shape = 's32[1]{0}', space=sflag, size = 0x4, scoped, tag = 'scoped memory for tpu_custom_call.1']
    #allocation4 [shape = 's32[1]{0}', space=sflag, size = 0x4, scoped, tag = 'scoped memory for tpu_custom_call.1']
    #allocation5 [shape = 'u8[16384]{0}', space=vmem, size = 0x4000, scoped, tag = 'input window, operand 1, single buffered']
    #allocation6 [shape = 's32[1]{0}', space=sflag, size = 0x4, scoped, tag = 'scoped memory for tpu_custom_call.1']
    #allocation7 [shape = 'u8[8192]{0}', space=vmem, size = 0x2000, scoped, tag = 'output window, operand 0, single buffered']
    %10 = vsyncpa [#allocation3], 0
    %11 = vsyncpa [#allocation6], 0
    %12 = vsyncpa [#allocation4], 0
    // Predicated region
    $region2: #{tpu_custom_call.1} parent=1 // pred_check
      _
    $region3: #{tpu_custom_call.1} parent=1 // pred_check_branch
      %14 = sbr.rel (0) target = $region5
    $region4: #{tpu_custom_call.1} parent=1 // pred_region
      %s16 = ssub.s32 256, 256
      %17 = vsyncadd [#allocation3], %s16
      %s18 = sshll.u32 [#allocation2], 4
      %s19 = int_to_ptr.vmem [resolvable:$true] %s18
      %24 = dma.hbm_to_vmem [thread:$0]  %s0, 256, %s19, [#allocation3], 128, 128, 8
    $region5: #{tpu_custom_call.1} parent=1 // pred_fallthru
      _
    // Predicated region
    $region6: #{tpu_custom_call.1} parent=1 // pred_check
      _
    $region7: #{tpu_custom_call.1} parent=1 // pred_check_branch
      %26 = sbr.rel (0) target = $region9
    $region8: #{tpu_custom_call.1} parent=1 // pred_region
      %s28 = ssub.s32 512, 512
      %29 = vsyncadd [#allocation6], %s28
      %s30 = sshll.u32 [#allocation5], 4
      %s31 = int_to_ptr.vmem [resolvable:$true] %s30
      %36 = dma.hbm_to_vmem [thread:$0]  %s1, 512, %s31, [#allocation6], 128, 128, 8
    $region9: #{tpu_custom_call.1} parent=1 // pred_fallthru
      _
    // Predicated region
    $region10: #{tpu_custom_call.1} parent=1 // pred_check
      _
    $region11: #{tpu_custom_call.1} parent=1 // pred_check_branch
      %38 = sbr.rel (0) target = $region13
    $region12: #{tpu_custom_call.1} parent=1 // pred_region
      _
    $region13: #{tpu_custom_call.1} parent=1 // pred_fallthru
      _
    // Predicated region
    $region14: #{tpu_custom_call.1} parent=1 // pred_check
      _
    $region15: #{tpu_custom_call.1} parent=1 // pred_check_branch
      %40 = sbr.rel (0) target = $region17
    $region16: #{tpu_custom_call.1} parent=1 // pred_region
      _
    $region17: #{tpu_custom_call.1} parent=1 // pred_fallthru
      _
    // Predicated region
    $region18: #{tpu_custom_call.1} parent=1 // pred_check
      _
    $region19: #{tpu_custom_call.1} parent=1 // pred_check_branch
      %42 = sbr.rel (0) target = $region21
    $region20: #{tpu_custom_call.1} parent=1 // pred_region
      _
    $region21: #{tpu_custom_call.1} parent=1 // pred_fallthru
      _
    // Predicated region
    $region22: #{tpu_custom_call.1} parent=1 // pred_check
      _
    $region23: #{tpu_custom_call.1} parent=1 // pred_check_branch
      %44 = sbr.rel (0) target = $region25
    $region24: #{tpu_custom_call.1} parent=1 // pred_region
      %45 = dma.done [#allocation3], 256
    $region25: #{tpu_custom_call.1} parent=1 // pred_fallthru
      _
    // Predicated region
    $region26: #{tpu_custom_call.1} parent=1 // pred_check
      _
    $region27: #{tpu_custom_call.1} parent=1 // pred_check_branch
      %47 = sbr.rel (0) target = $region29
    $region28: #{tpu_custom_call.1} parent=1 // pred_region
      %48 = dma.done [#allocation6], 512
    $region29: #{tpu_custom_call.1} parent=1 // pred_fallthru
      _
    %v49 = vld [vmem:[#allocation2] sm:$0xff]
    %v50 = vld [vmem:[#allocation2 + $0x8] sm:$0xff]
    %v51 = vld [vmem:[#allocation5] sm:$0xff]
    %v52 = vld [vmem:[#allocation5 + $0x8] sm:$0xff]
    %v53 = vld [vmem:[#allocation5 + $0x10] sm:$0xff]
    %v54 = vld [vmem:[#allocation5 + $0x18] sm:$0xff]
    %v55 = vld [vmem:[%s2] sm:$0x1]
    %v57 = vlaneseq
    %v58 = vshrl.u32 %v57, 7
    %v59 = vsub.s32 0, %v58
    %v60 = vrot.slane %v55, %v59
    %vm62 = vcmask 261120
    %v64 = vsel %vm62, %v49, 0
    %v67 = vsel %vm62, %v50, 0
    %69 = vmatprep.subr.mxu0 0.0
    %70 = vmatpush1.msra.mxu0 %v51
    %71 = vmatprep.subr.mxu0 0.0
    %72 = vmatpush1.msra.mxu0 %v52
    %73 = vmatprep.subr.mxu0 0.0
    %74 = vmatpush1.msra.mxu0 %v53
    %75 = vmatprep.subr.mxu0 0.0
    %76 = vmatpush1.msra.mxu0 %v54
    %77 = vmatprep.subr.mxu0 0.0
    %78 = vmatpush1.msra.mxu0 0.0
    %79 = vmatprep.subr.mxu0 0.0
    %80 = vmatpush1.msra.mxu0 0.0
    %81 = vmatprep.subr.mxu0 0.0
    %82 = vmatpush1.msra.mxu0 0.0
    %83 = vmatprep.subr.mxu0 0.0
    %84 = vmatpush1.msra.mxu0 0.0
    %85 = vmatprep.subr.mxu0 0.0
    %86 = vmatpush1.msra.mxu0 0.0
    %87 = vmatprep.subr.mxu0 0.0
    %88 = vmatpush1.msra.mxu0 0.0
    %89 = vmatprep.subr.mxu0 0.0
    %90 = vmatpush1.msra.mxu0 0.0
    %91 = vmatprep.subr.mxu0 0.0
    %92 = vmatpush1.msra.mxu0 0.0
    %93 = vmatprep.subr.mxu0 0.0
    %94 = vmatpush1.msra.mxu0 0.0
    %95 = vmatprep.subr.mxu0 0.0
    %96 = vmatpush1.msra.mxu0 0.0
    %97 = vmatprep.subr.mxu0 0.0
    %98 = vmatpush1.msra.mxu0 0.0
    %99 = vmatprep.subr.mxu0 0.0
    %100 = vmatpush1.msra.mxu0 0.0
    %101 = vmatprep.subr.mxu0 0.0
    %102 = vmatpush1.msra.mxu0 0.0
    %103 = vmatprep.subr.mxu0 0.0
    %104 = vmatpush1.msra.mxu0 0.0
    %105 = vmatprep.subr.mxu0 0.0
    %106 = vmatpush1.msra.mxu0 0.0
    %107 = vmatprep.subr.mxu0 0.0
    %108 = vmatpush1.msra.mxu0 0.0
    %109 = vmatprep.subr.mxu0 0.0
    %110 = vmatpush1.msra.mxu0 0.0
    %111 = vmatprep.subr.mxu0 0.0
    %112 = vmatpush1.msra.mxu0 0.0
    %113 = vmatprep.subr.mxu0 0.0
    %114 = vmatpush1.msra.mxu0 0.0
    %115 = vmatprep.subr.mxu0 0.0
    %116 = vmatpush1.msra.mxu0 0.0
    %117 = vmatprep.subr.mxu0 0.0
    %118 = vmatpush1.msra.mxu0 0.0
    %119 = vmatprep.subr.mxu0 0.0
    %120 = vmatpush1.msra.mxu0 0.0
    %121 = vmatprep.subr.mxu0 0.0
    %122 = vmatpush1.msra.mxu0 0.0
    %123 = vmatprep.subr.mxu0 0.0
    %124 = vmatpush1.msra.mxu0 0.0
    %125 = vmatprep.subr.mxu0 0.0
    %126 = vmatpush1.msra.mxu0 0.0
    %127 = vmatprep.subr.mxu0 0.0
    %128 = vmatpush1.msra.mxu0 0.0
    %129 = vmatprep.subr.mxu0 0.0
    %130 = vmatpush1.msra.mxu0 0.0
    %131 = vmatprep.subr.mxu0 0.0
    %132 = vmatpush1.msra.mxu0 0.0
    %133 = vmatprep.mubr.f32.mxu0 0.0
    %134 = vmatmul.mubr.f32.gmra.mrb[0].mxu0 %v64
    %v135 = vpop.f32.mrb[0].mxu0
    %v136 = vadd.f32 %v60, %v135
    %v137 = vpop.f32.mrb[0].mxu0
    %138 = vmatprep.mubr.f32.mxu0 0.0
    %139 = vmatmul.mubr.f32.gmra.mrb[0].mxu0 %v67
    %v140 = vpop.f32.mrb[0].mxu0
    %v141 = vadd.f32 %v60, %v140
    %v142 = vpop.f32.mrb[0].mxu0
    %143 = vdwg.mxu0
    %146 = vrot.lane.b32.xlu0 %v136, 120
    %v147 = vpop.permute.xlu0 %146
    %148 = vrot.lane.b32.xlu0 %v141, 120
    %v149 = vpop.permute.xlu0 %148
    %152 = vrot.lane.b32.xlu0 %v136, 112
    %v153 = vpop.permute.xlu0 %152
    %154 = vrot.lane.b32.xlu0 %v141, 112
    %v155 = vpop.permute.xlu0 %154
    %158 = vrot.lane.b32.xlu0 %v136, 104
    %v159 = vpop.permute.xlu0 %158
    %160 = vrot.lane.b32.xlu0 %v141, 104
    %v161 = vpop.permute.xlu0 %160
    %v164 = vcombine.low %v136, %v153
    %v165 = vcombine.high %v136, %v153
    %v167 = vunpack.c.l.s4 1983009808
    %v168 = vunpack.c.0.s8 %v167
    %v169 = vlaneseq
    %v170 = vshrl.u32 %v169, 7
    %v171 = vsub.s32 %v168, %v170
    %v172 = vrot.slane %v164, %v171
    %v174 = vunpack.c.l.s4 1983009808
    %v175 = vunpack.c.0.s8 %v174
    %v176 = vlaneseq
    %v177 = vshrl.u32 %v176, 7
    %v178 = vsub.s32 %v175, %v177
    %v179 = vrot.slane %v165, %v178
    %v180 = vcombine.low %v147, %v159
    %v181 = vcombine.high %v147, %v159
    %v183 = vunpack.c.l.s4 1983009808
    %v184 = vunpack.c.0.s8 %v183
    %v185 = vlaneseq
    %v186 = vshrl.u32 %v185, 7
    %v187 = vsub.s32 %v184, %v186
    %v188 = vrot.slane %v180, %v187
    %v190 = vunpack.c.l.s4 1983009808
    %v191 = vunpack.c.0.s8 %v190
    %v192 = vlaneseq
    %v193 = vshrl.u32 %v192, 7
    %v194 = vsub.s32 %v191, %v193
    %v195 = vrot.slane %v181, %v194
    %v196 = vcombine.low %v172, %v188
    %v197 = vcombine.high %v172, %v188
    %v199 = vunpack.c.l.s4 1934713408
    %v200 = vunpack.c.0.s8 %v199
    %v201 = vlaneseq
    %v202 = vshrl.u32 %v201, 7
    %v203 = vsub.s32 %v200, %v202
    %v204 = vrot.slane %v196, %v203
    %v206 = vunpack.c.l.s4 1934713408
    %v207 = vunpack.c.0.s8 %v206
    %v208 = vlaneseq
    %v209 = vshrl.u32 %v208, 7
    %v210 = vsub.s32 %v207, %v209
    %v211 = vrot.slane %v197, %v210
    %v212 = vcombine.low %v179, %v195
    %v213 = vcombine.high %v179, %v195
    %v215 = vunpack.c.l.s4 1934713408
    %v216 = vunpack.c.0.s8 %v215
    %v217 = vlaneseq
    %v218 = vshrl.u32 %v217, 7
    %v219 = vsub.s32 %v216, %v218
    %v220 = vrot.slane %v212, %v219
    %v222 = vunpack.c.l.s4 1934713408
    %v223 = vunpack.c.0.s8 %v222
    %v224 = vlaneseq
    %v225 = vshrl.u32 %v224, 7
    %v226 = vsub.s32 %v223, %v225
    %v227 = vrot.slane %v213, %v226
    %v228 = vcombine.high %v204, 0.0
    %v229 = vcombine.high %v211, 0.0
    %v230 = vcombine.high %v220, 0.0
    %v231 = vcombine.high %v227, 0.0
    %v232 = vcombine.low %v141, %v155
    %v233 = vcombine.high %v141, %v155
    %v235 = vunpack.c.l.s4 1983009808
    %v236 = vunpack.c.0.s8 %v235
    %v237 = vlaneseq
    %v238 = vshrl.u32 %v237, 7
    %v239 = vsub.s32 %v236, %v238
    %v240 = vrot.slane %v232, %v239
    %v242 = vunpack.c.l.s4 1983009808
    %v243 = vunpack.c.0.s8 %v242
    %v244 = vlaneseq
    %v245 = vshrl.u32 %v244, 7
    %v246 = vsub.s32 %v243, %v245
    %v247 = vrot.slane %v233, %v246
    %v248 = vcombine.low %v149, %v161
    %v249 = vcombine.high %v149, %v161
    %v251 = vunpack.c.l.s4 1983009808
    %v252 = vunpack.c.0.s8 %v251
    %v253 = vlaneseq
    %v254 = vshrl.u32 %v253, 7
    %v255 = vsub.s32 %v252, %v254
    %v256 = vrot.slane %v248, %v255
    %v258 = vunpack.c.l.s4 1983009808
    %v259 = vunpack.c.0.s8 %v258
    %v260 = vlaneseq
    %v261 = vshrl.u32 %v260, 7
    %v262 = vsub.s32 %v259, %v261
    %v263 = vrot.slane %v249, %v262
    %v264 = vcombine.low %v240, %v256
    %v265 = vcombine.high %v240, %v256
    %v267 = vunpack.c.l.s4 1934713408
    %v268 = vunpack.c.0.s8 %v267
    %v269 = vlaneseq
    %v270 = vshrl.u32 %v269, 7
    %v271 = vsub.s32 %v268, %v270
    %v272 = vrot.slane %v264, %v271
    %v274 = vunpack.c.l.s4 1934713408
    %v275 = vunpack.c.0.s8 %v274
    %v276 = vlaneseq
    %v277 = vshrl.u32 %v276, 7
    %v278 = vsub.s32 %v275, %v277
    %v279 = vrot.slane %v265, %v278
    %v280 = vcombine.low %v247, %v263
    %v281 = vcombine.high %v247, %v263
    %v283 = vunpack.c.l.s4 1934713408
    %v284 = vunpack.c.0.s8 %v283
    %v285 = vlaneseq
    %v286 = vshrl.u32 %v285, 7
    %v287 = vsub.s32 %v284, %v286
    %v288 = vrot.slane %v280, %v287
    %v290 = vunpack.c.l.s4 1934713408
    %v291 = vunpack.c.0.s8 %v290
    %v292 = vlaneseq
    %v293 = vshrl.u32 %v292, 7
    %v294 = vsub.s32 %v291, %v293
    %v295 = vrot.slane %v281, %v294
    %v296 = vcombine.high %v272, 0.0
    %v297 = vcombine.high %v279, 0.0
    %v298 = vcombine.high %v288, 0.0
    %v299 = vcombine.high %v295, 0.0
    %v300 = vcombine.low %v204, %v211
    %v302 = vunpack.c.l.s4 1983009808
    %v303 = vunpack.c.0.s8 %v302
    %v304 = vlaneseq
    %v305 = vshrl.u32 %v304, 7
    %v306 = vsub.s32 %v303, %v305
    %v307 = vrot.slane %v300, %v306
    %v308 = vcombine.low %v228, %v229
    %v310 = vunpack.c.l.s4 1983009808
    %v311 = vunpack.c.0.s8 %v310
    %v312 = vlaneseq
    %v313 = vshrl.u32 %v312, 7
    %v314 = vsub.s32 %v311, %v313
    %v315 = vrot.slane %v308, %v314
    %v316 = vcombine.low %v220, %v227
    %v318 = vunpack.c.l.s4 1983009808
    %v319 = vunpack.c.0.s8 %v318
    %v320 = vlaneseq
    %v321 = vshrl.u32 %v320, 7
    %v322 = vsub.s32 %v319, %v321
    %v323 = vrot.slane %v316, %v322
    %v324 = vcombine.low %v230, %v231
    %v326 = vunpack.c.l.s4 1983009808
    %v327 = vunpack.c.0.s8 %v326
    %v328 = vlaneseq
    %v329 = vshrl.u32 %v328, 7
    %v330 = vsub.s32 %v327, %v329
    %v331 = vrot.slane %v324, %v330
    %v332 = vcombine.low %v307, %v315
    %v333 = vcombine.high %v307, %v315
    %v335 = vunpack.c.l.s4 1934713408
    %v336 = vunpack.c.0.s8 %v335
    %v337 = vlaneseq
    %v338 = vshrl.u32 %v337, 7
    %v339 = vsub.s32 %v336, %v338
    %v340 = vrot.slane %v332, %v339
    %v342 = vunpack.c.l.s4 1934713408
    %v343 = vunpack.c.0.s8 %v342
    %v344 = vlaneseq
    %v345 = vshrl.u32 %v344, 7
    %v346 = vsub.s32 %v343, %v345
    %v347 = vrot.slane %v333, %v346
    %v348 = vcombine.low %v323, %v331
    %v349 = vcombine.high %v323, %v331
    %v351 = vunpack.c.l.s4 1934713408
    %v352 = vunpack.c.0.s8 %v351
    %v353 = vlaneseq
    %v354 = vshrl.u32 %v353, 7
    %v355 = vsub.s32 %v352, %v354
    %v356 = vrot.slane %v348, %v355
    %v358 = vunpack.c.l.s4 1934713408
    %v359 = vunpack.c.0.s8 %v358
    %v360 = vlaneseq
    %v361 = vshrl.u32 %v360, 7
    %v362 = vsub.s32 %v359, %v361
    %v363 = vrot.slane %v349, %v362
    %v364 = vcombine.low %v340, %v356
    %v365 = vcombine.high %v340, %v356
    %v366 = vcombine.low %v347, %v363
    %v367 = vcombine.high %v347, %v363
    %v368 = vcombine.low %v272, %v279
    %v370 = vunpack.c.l.s4 1983009808
    %v371 = vunpack.c.0.s8 %v370
    %v372 = vlaneseq
    %v373 = vshrl.u32 %v372, 7
    %v374 = vsub.s32 %v371, %v373
    %v375 = vrot.slane %v368, %v374
    %v376 = vcombine.low %v296, %v297
    %v378 = vunpack.c.l.s4 1983009808
    %v379 = vunpack.c.0.s8 %v378
    %v380 = vlaneseq
    %v381 = vshrl.u32 %v380, 7
    %v382 = vsub.s32 %v379, %v381
    %v383 = vrot.slane %v376, %v382
    %v384 = vcombine.low %v288, %v295
    %v386 = vunpack.c.l.s4 1983009808
    %v387 = vunpack.c.0.s8 %v386
    %v388 = vlaneseq
    %v389 = vshrl.u32 %v388, 7
    %v390 = vsub.s32 %v387, %v389
    %v391 = vrot.slane %v384, %v390
    %v392 = vcombine.low %v298, %v299
    %v394 = vunpack.c.l.s4 1983009808
    %v395 = vunpack.c.0.s8 %v394
    %v396 = vlaneseq
    %v397 = vshrl.u32 %v396, 7
    %v398 = vsub.s32 %v395, %v397
    %v399 = vrot.slane %v392, %v398
    %v400 = vcombine.low %v375, %v383
    %v401 = vcombine.high %v375, %v383
    %v403 = vunpack.c.l.s4 1934713408
    %v404 = vunpack.c.0.s8 %v403
    %v405 = vlaneseq
    %v406 = vshrl.u32 %v405, 7
    %v407 = vsub.s32 %v404, %v406
    %v408 = vrot.slane %v400, %v407
    %v410 = vunpack.c.l.s4 1934713408
    %v411 = vunpack.c.0.s8 %v410
    %v412 = vlaneseq
    %v413 = vshrl.u32 %v412, 7
    %v414 = vsub.s32 %v411, %v413
    %v415 = vrot.slane %v401, %v414
    %v416 = vcombine.low %v391, %v399
    %v417 = vcombine.high %v391, %v399
    %v419 = vunpack.c.l.s4 1934713408
    %v420 = vunpack.c.0.s8 %v419
    %v421 = vlaneseq
    %v422 = vshrl.u32 %v421, 7
    %v423 = vsub.s32 %v420, %v422
    %v424 = vrot.slane %v416, %v423
    %v426 = vunpack.c.l.s4 1934713408
    %v427 = vunpack.c.0.s8 %v426
    %v428 = vlaneseq
    %v429 = vshrl.u32 %v428, 7
    %v430 = vsub.s32 %v427, %v429
    %v431 = vrot.slane %v417, %v430
    %v432 = vcombine.low %v408, %v424
    %v433 = vcombine.high %v408, %v424
    %v434 = vcombine.low %v415, %v431
    %v435 = vcombine.high %v415, %v431
    %436 = vrot.lane.b32.xlu0 %v136, 96
    %v437 = vpop.permute.xlu0 %436
    %438 = vrot.lane.b32.xlu0 %v141, 96
    %v439 = vpop.permute.xlu0 %438
    %440 = vrot.lane.b32.xlu0 %v147, 96
    %v441 = vpop.permute.xlu0 %440
    %442 = vrot.lane.b32.xlu0 %v149, 96
    %v443 = vpop.permute.xlu0 %442
    %444 = vrot.lane.b32.xlu0 %v153, 96
    %v445 = vpop.permute.xlu0 %444
    %446 = vrot.lane.b32.xlu0 %v155, 96
    %v447 = vpop.permute.xlu0 %446
    %448 = vrot.lane.b32.xlu0 %v159, 96
    %v449 = vpop.permute.xlu0 %448
    %450 = vrot.lane.b32.xlu0 %v161, 96
    %v451 = vpop.permute.xlu0 %450
    %v460 = vcombine.low %v437, %v445
    %v461 = vcombine.high %v437, %v445
    %v463 = vunpack.c.l.s4 1983009808
    %v464 = vunpack.c.0.s8 %v463
    %v465 = vlaneseq
    %v466 = vshrl.u32 %v465, 7
    %v467 = vsub.s32 %v464, %v466
    %v468 = vrot.slane %v460, %v467
    %v470 = vunpack.c.l.s4 1983009808
    %v471 = vunpack.c.0.s8 %v470
    %v472 = vlaneseq
    %v473 = vshrl.u32 %v472, 7
    %v474 = vsub.s32 %v471, %v473
    %v475 = vrot.slane %v461, %v474
    %v476 = vcombine.low %v441, %v449
    %v477 = vcombine.high %v441, %v449
    %v479 = vunpack.c.l.s4 1983009808
    %v480 = vunpack.c.0.s8 %v479
    %v481 = vlaneseq
    %v482 = vshrl.u32 %v481, 7
    %v483 = vsub.s32 %v480, %v482
    %v484 = vrot.slane %v476, %v483
    %v486 = vunpack.c.l.s4 1983009808
    %v487 = vunpack.c.0.s8 %v486
    %v488 = vlaneseq
    %v489 = vshrl.u32 %v488, 7
    %v490 = vsub.s32 %v487, %v489
    %v491 = vrot.slane %v477, %v490
    %v492 = vcombine.low %v468, %v484
    %v493 = vcombine.high %v468, %v484
    %v495 = vunpack.c.l.s4 1934713408
    %v496 = vunpack.c.0.s8 %v495
    %v497 = vlaneseq
    %v498 = vshrl.u32 %v497, 7
    %v499 = vsub.s32 %v496, %v498
    %v500 = vrot.slane %v492, %v499
    %v502 = vunpack.c.l.s4 1934713408
    %v503 = vunpack.c.0.s8 %v502
    %v504 = vlaneseq
    %v505 = vshrl.u32 %v504, 7
    %v506 = vsub.s32 %v503, %v505
    %v507 = vrot.slane %v493, %v506
    %v508 = vcombine.low %v475, %v491
    %v509 = vcombine.high %v475, %v491
    %v511 = vunpack.c.l.s4 1934713408
    %v512 = vunpack.c.0.s8 %v511
    %v513 = vlaneseq
    %v514 = vshrl.u32 %v513, 7
    %v515 = vsub.s32 %v512, %v514
    %v516 = vrot.slane %v508, %v515
    %v518 = vunpack.c.l.s4 1934713408
    %v519 = vunpack.c.0.s8 %v518
    %v520 = vlaneseq
    %v521 = vshrl.u32 %v520, 7
    %v522 = vsub.s32 %v519, %v521
    %v523 = vrot.slane %v509, %v522
    %v524 = vcombine.high %v500, 0.0
    %v525 = vcombine.high %v507, 0.0
    %v526 = vcombine.high %v516, 0.0
    %v527 = vcombine.high %v523, 0.0
    %v528 = vcombine.low %v439, %v447
    %v529 = vcombine.high %v439, %v447
    %v531 = vunpack.c.l.s4 1983009808
    %v532 = vunpack.c.0.s8 %v531
    %v533 = vlaneseq
    %v534 = vshrl.u32 %v533, 7
    %v535 = vsub.s32 %v532, %v534
    %v536 = vrot.slane %v528, %v535
    %v538 = vunpack.c.l.s4 1983009808
    %v539 = vunpack.c.0.s8 %v538
    %v540 = vlaneseq
    %v541 = vshrl.u32 %v540, 7
    %v542 = vsub.s32 %v539, %v541
    %v543 = vrot.slane %v529, %v542
    %v544 = vcombine.low %v443, %v451
    %v545 = vcombine.high %v443, %v451
    %v547 = vunpack.c.l.s4 1983009808
    %v548 = vunpack.c.0.s8 %v547
    %v549 = vlaneseq
    %v550 = vshrl.u32 %v549, 7
    %v551 = vsub.s32 %v548, %v550
    %v552 = vrot.slane %v544, %v551
    %v554 = vunpack.c.l.s4 1983009808
    %v555 = vunpack.c.0.s8 %v554
    %v556 = vlaneseq
    %v557 = vshrl.u32 %v556, 7
    %v558 = vsub.s32 %v555, %v557
    %v559 = vrot.slane %v545, %v558
    %v560 = vcombine.low %v536, %v552
    %v561 = vcombine.high %v536, %v552
    %v563 = vunpack.c.l.s4 1934713408
    %v564 = vunpack.c.0.s8 %v563
    %v565 = vlaneseq
    %v566 = vshrl.u32 %v565, 7
    %v567 = vsub.s32 %v564, %v566
    %v568 = vrot.slane %v560, %v567
    %v570 = vunpack.c.l.s4 1934713408
    %v571 = vunpack.c.0.s8 %v570
    %v572 = vlaneseq
    %v573 = vshrl.u32 %v572, 7
    %v574 = vsub.s32 %v571, %v573
    %v575 = vrot.slane %v561, %v574
    %v576 = vcombine.low %v543, %v559
    %v577 = vcombine.high %v543, %v559
    %v579 = vunpack.c.l.s4 1934713408
    %v580 = vunpack.c.0.s8 %v579
    %v581 = vlaneseq
    %v582 = vshrl.u32 %v581, 7
    %v583 = vsub.s32 %v580, %v582
    %v584 = vrot.slane %v576, %v583
    %v586 = vunpack.c.l.s4 1934713408
    %v587 = vunpack.c.0.s8 %v586
    %v588 = vlaneseq
    %v589 = vshrl.u32 %v588, 7
    %v590 = vsub.s32 %v587, %v589
    %v591 = vrot.slane %v577, %v590
    %v592 = vcombine.high %v568, 0.0
    %v593 = vcombine.high %v575, 0.0
    %v594 = vcombine.high %v584, 0.0
    %v595 = vcombine.high %v591, 0.0
    %v596 = vcombine.low %v500, %v507
    %v598 = vunpack.c.l.s4 1983009808
    %v599 = vunpack.c.0.s8 %v598
    %v600 = vlaneseq
    %v601 = vshrl.u32 %v600, 7
    %v602 = vsub.s32 %v599, %v601
    %v603 = vrot.slane %v596, %v602
    %v604 = vcombine.low %v524, %v525
    %v606 = vunpack.c.l.s4 1983009808
    %v607 = vunpack.c.0.s8 %v606
    %v608 = vlaneseq
    %v609 = vshrl.u32 %v608, 7
    %v610 = vsub.s32 %v607, %v609
    %v611 = vrot.slane %v604, %v610
    %v612 = vcombine.low %v516, %v523
    %v614 = vunpack.c.l.s4 1983009808
    %v615 = vunpack.c.0.s8 %v614
    %v616 = vlaneseq
    %v617 = vshrl.u32 %v616, 7
    %v618 = vsub.s32 %v615, %v617
    %v619 = vrot.slane %v612, %v618
    %v620 = vcombine.low %v526, %v527
    %v622 = vunpack.c.l.s4 1983009808
    %v623 = vunpack.c.0.s8 %v622
    %v624 = vlaneseq
    %v625 = vshrl.u32 %v624, 7
    %v626 = vsub.s32 %v623, %v625
    %v627 = vrot.slane %v620, %v626
    %v628 = vcombine.low %v603, %v611
    %v629 = vcombine.high %v603, %v611
    %v631 = vunpack.c.l.s4 1934713408
    %v632 = vunpack.c.0.s8 %v631
    %v633 = vlaneseq
    %v634 = vshrl.u32 %v633, 7
    %v635 = vsub.s32 %v632, %v634
    %v636 = vrot.slane %v628, %v635
    %v638 = vunpack.c.l.s4 1934713408
    %v639 = vunpack.c.0.s8 %v638
    %v640 = vlaneseq
    %v641 = vshrl.u32 %v640, 7
    %v642 = vsub.s32 %v639, %v641
    %v643 = vrot.slane %v629, %v642
    %v644 = vcombine.low %v619, %v627
    %v645 = vcombine.high %v619, %v627
    %v647 = vunpack.c.l.s4 1934713408
    %v648 = vunpack.c.0.s8 %v647
    %v649 = vlaneseq
    %v650 = vshrl.u32 %v649, 7
    %v651 = vsub.s32 %v648, %v650
    %v652 = vrot.slane %v644, %v651
    %v654 = vunpack.c.l.s4 1934713408
    %v655 = vunpack.c.0.s8 %v654
    %v656 = vlaneseq
    %v657 = vshrl.u32 %v656, 7
    %v658 = vsub.s32 %v655, %v657
    %v659 = vrot.slane %v645, %v658
    %v660 = vcombine.low %v636, %v652
    %v661 = vcombine.high %v636, %v652
    %v662 = vcombine.low %v643, %v659
    %v663 = vcombine.high %v643, %v659
    %v664 = vcombine.low %v568, %v575
    %v666 = vunpack.c.l.s4 1983009808
    %v667 = vunpack.c.0.s8 %v666
    %v668 = vlaneseq
    %v669 = vshrl.u32 %v668, 7
    %v670 = vsub.s32 %v667, %v669
    %v671 = vrot.slane %v664, %v670
    %v672 = vcombine.low %v592, %v593
    %v674 = vunpack.c.l.s4 1983009808
    %v675 = vunpack.c.0.s8 %v674
    %v676 = vlaneseq
    %v677 = vshrl.u32 %v676, 7
    %v678 = vsub.s32 %v675, %v677
    %v679 = vrot.slane %v672, %v678
    %v680 = vcombine.low %v584, %v591
    %v682 = vunpack.c.l.s4 1983009808
    %v683 = vunpack.c.0.s8 %v682
    %v684 = vlaneseq
    %v685 = vshrl.u32 %v684, 7
    %v686 = vsub.s32 %v683, %v685
    %v687 = vrot.slane %v680, %v686
    %v688 = vcombine.low %v594, %v595
    %v690 = vunpack.c.l.s4 1983009808
    %v691 = vunpack.c.0.s8 %v690
    %v692 = vlaneseq
    %v693 = vshrl.u32 %v692, 7
    %v694 = vsub.s32 %v691, %v693
    %v695 = vrot.slane %v688, %v694
    %v696 = vcombine.low %v671, %v679
    %v697 = vcombine.high %v671, %v679
    %v699 = vunpack.c.l.s4 1934713408
    %v700 = vunpack.c.0.s8 %v699
    %v701 = vlaneseq
    %v702 = vshrl.u32 %v701, 7
    %v703 = vsub.s32 %v700, %v702
    %v704 = vrot.slane %v696, %v703
    %v706 = vunpack.c.l.s4 1934713408
    %v707 = vunpack.c.0.s8 %v706
    %v708 = vlaneseq
    %v709 = vshrl.u32 %v708, 7
    %v710 = vsub.s32 %v707, %v709
    %v711 = vrot.slane %v697, %v710
    %v712 = vcombine.low %v687, %v695
    %v713 = vcombine.high %v687, %v695
    %v715 = vunpack.c.l.s4 1934713408
    %v716 = vunpack.c.0.s8 %v715
    %v717 = vlaneseq
    %v718 = vshrl.u32 %v717, 7
    %v719 = vsub.s32 %v716, %v718
    %v720 = vrot.slane %v712, %v719
    %v722 = vunpack.c.l.s4 1934713408
    %v723 = vunpack.c.0.s8 %v722
    %v724 = vlaneseq
    %v725 = vshrl.u32 %v724, 7
    %v726 = vsub.s32 %v723, %v725
    %v727 = vrot.slane %v713, %v726
    %v728 = vcombine.low %v704, %v720
    %v729 = vcombine.high %v704, %v720
    %v730 = vcombine.low %v711, %v727
    %v731 = vcombine.high %v711, %v727
    %732 = vrot.lane.b32.xlu0 %v136, 64
    %v733 = vpop.permute.xlu0 %732
    %734 = vrot.lane.b32.xlu0 %v141, 64
    %v735 = vpop.permute.xlu0 %734
    %736 = vrot.lane.b32.xlu0 %v147, 64
    %v737 = vpop.permute.xlu0 %736
    %738 = vrot.lane.b32.xlu0 %v149, 64
    %v739 = vpop.permute.xlu0 %738
    %740 = vrot.lane.b32.xlu0 %v153, 64
    %v741 = vpop.permute.xlu0 %740
    %742 = vrot.lane.b32.xlu0 %v155, 64
    %v743 = vpop.permute.xlu0 %742
    %744 = vrot.lane.b32.xlu0 %v159, 64
    %v745 = vpop.permute.xlu0 %744
    %746 = vrot.lane.b32.xlu0 %v161, 64
    %v747 = vpop.permute.xlu0 %746
    %v756 = vcombine.low %v733, %v741
    %v757 = vcombine.high %v733, %v741
    %v759 = vunpack.c.l.s4 1983009808
    %v760 = vunpack.c.0.s8 %v759
    %v761 = vlaneseq
    %v762 = vshrl.u32 %v761, 7
    %v763 = vsub.s32 %v760, %v762
    %v764 = vrot.slane %v756, %v763
    %v766 = vunpack.c.l.s4 1983009808
    %v767 = vunpack.c.0.s8 %v766
    %v768 = vlaneseq
    %v769 = vshrl.u32 %v768, 7
    %v770 = vsub.s32 %v767, %v769
    %v771 = vrot.slane %v757, %v770
    %v772 = vcombine.low %v737, %v745
    %v773 = vcombine.high %v737, %v745
    %v775 = vunpack.c.l.s4 1983009808
    %v776 = vunpack.c.0.s8 %v775
    %v777 = vlaneseq
    %v778 = vshrl.u32 %v777, 7
    %v779 = vsub.s32 %v776, %v778
    %v780 = vrot.slane %v772, %v779
    %v782 = vunpack.c.l.s4 1983009808
    %v783 = vunpack.c.0.s8 %v782
    %v784 = vlaneseq
    %v785 = vshrl.u32 %v784, 7
    %v786 = vsub.s32 %v783, %v785
    %v787 = vrot.slane %v773, %v786
    %v788 = vcombine.low %v764, %v780
    %v789 = vcombine.high %v764, %v780
    %v791 = vunpack.c.l.s4 1934713408
    %v792 = vunpack.c.0.s8 %v791
    %v793 = vlaneseq
    %v794 = vshrl.u32 %v793, 7
    %v795 = vsub.s32 %v792, %v794
    %v796 = vrot.slane %v788, %v795
    %v798 = vunpack.c.l.s4 1934713408
    %v799 = vunpack.c.0.s8 %v798
    %v800 = vlaneseq
    %v801 = vshrl.u32 %v800, 7
    %v802 = vsub.s32 %v799, %v801
    %v803 = vrot.slane %v789, %v802
    %v804 = vcombine.low %v771, %v787
    %v805 = vcombine.high %v771, %v787
    %v807 = vunpack.c.l.s4 1934713408
    %v808 = vunpack.c.0.s8 %v807
    %v809 = vlaneseq
    %v810 = vshrl.u32 %v809, 7
    %v811 = vsub.s32 %v808, %v810
    %v812 = vrot.slane %v804, %v811
    %v814 = vunpack.c.l.s4 1934713408
    %v815 = vunpack.c.0.s8 %v814
    %v816 = vlaneseq
    %v817 = vshrl.u32 %v816, 7
    %v818 = vsub.s32 %v815, %v817
    %v819 = vrot.slane %v805, %v818
    %v820 = vcombine.high %v796, 0.0
    %v821 = vcombine.high %v803, 0.0
    %v822 = vcombine.high %v812, 0.0
    %v823 = vcombine.high %v819, 0.0
    %v824 = vcombine.low %v735, %v743
    %v825 = vcombine.high %v735, %v743
    %v827 = vunpack.c.l.s4 1983009808
    %v828 = vunpack.c.0.s8 %v827
    %v829 = vlaneseq
    %v830 = vshrl.u32 %v829, 7
    %v831 = vsub.s32 %v828, %v830
    %v832 = vrot.slane %v824, %v831
    %v834 = vunpack.c.l.s4 1983009808
    %v835 = vunpack.c.0.s8 %v834
    %v836 = vlaneseq
    %v837 = vshrl.u32 %v836, 7
    %v838 = vsub.s32 %v835, %v837
    %v839 = vrot.slane %v825, %v838
    %v840 = vcombine.low %v739, %v747
    %v841 = vcombine.high %v739, %v747
    %v843 = vunpack.c.l.s4 1983009808
    %v844 = vunpack.c.0.s8 %v843
    %v845 = vlaneseq
    %v846 = vshrl.u32 %v845, 7
    %v847 = vsub.s32 %v844, %v846
    %v848 = vrot.slane %v840, %v847
    %v850 = vunpack.c.l.s4 1983009808
    %v851 = vunpack.c.0.s8 %v850
    %v852 = vlaneseq
    %v853 = vshrl.u32 %v852, 7
    %v854 = vsub.s32 %v851, %v853
    %v855 = vrot.slane %v841, %v854
    %v856 = vcombine.low %v832, %v848
    %v857 = vcombine.high %v832, %v848
    %v859 = vunpack.c.l.s4 1934713408
    %v860 = vunpack.c.0.s8 %v859
    %v861 = vlaneseq
    %v862 = vshrl.u32 %v861, 7
    %v863 = vsub.s32 %v860, %v862
    %v864 = vrot.slane %v856, %v863
    %v866 = vunpack.c.l.s4 1934713408
    %v867 = vunpack.c.0.s8 %v866
    %v868 = vlaneseq
    %v869 = vshrl.u32 %v868, 7
    %v870 = vsub.s32 %v867, %v869
    %v871 = vrot.slane %v857, %v870
    %v872 = vcombine.low %v839, %v855
    %v873 = vcombine.high %v839, %v855
    %v875 = vunpack.c.l.s4 1934713408
    %v876 = vunpack.c.0.s8 %v875
    %v877 = vlaneseq
    %v878 = vshrl.u32 %v877, 7
    %v879 = vsub.s32 %v876, %v878
    %v880 = vrot.slane %v872, %v879
    %v882 = vunpack.c.l.s4 1934713408
    %v883 = vunpack.c.0.s8 %v882
    %v884 = vlaneseq
    %v885 = vshrl.u32 %v884, 7
    %v886 = vsub.s32 %v883, %v885
    %v887 = vrot.slane %v873, %v886
    %v888 = vcombine.high %v864, 0.0
    %v889 = vcombine.high %v871, 0.0
    %v890 = vcombine.high %v880, 0.0
    %v891 = vcombine.high %v887, 0.0
    %v892 = vcombine.low %v796, %v803
    %v894 = vunpack.c.l.s4 1983009808
    %v895 = vunpack.c.0.s8 %v894
    %v896 = vlaneseq
    %v897 = vshrl.u32 %v896, 7
    %v898 = vsub.s32 %v895, %v897
    %v899 = vrot.slane %v892, %v898
    %v900 = vcombine.low %v820, %v821
    %v902 = vunpack.c.l.s4 1983009808
    %v903 = vunpack.c.0.s8 %v902
    %v904 = vlaneseq
    %v905 = vshrl.u32 %v904, 7
    %v906 = vsub.s32 %v903, %v905
    %v907 = vrot.slane %v900, %v906
    %v908 = vcombine.low %v812, %v819
    %v910 = vunpack.c.l.s4 1983009808
    %v911 = vunpack.c.0.s8 %v910
    %v912 = vlaneseq
    %v913 = vshrl.u32 %v912, 7
    %v914 = vsub.s32 %v911, %v913
    %v915 = vrot.slane %v908, %v914
    %v916 = vcombine.low %v822, %v823
    %v918 = vunpack.c.l.s4 1983009808
    %v919 = vunpack.c.0.s8 %v918
    %v920 = vlaneseq
    %v921 = vshrl.u32 %v920, 7
    %v922 = vsub.s32 %v919, %v921
    %v923 = vrot.slane %v916, %v922
    %v924 = vcombine.low %v899, %v907
    %v925 = vcombine.high %v899, %v907
    %v927 = vunpack.c.l.s4 1934713408
    %v928 = vunpack.c.0.s8 %v927
    %v929 = vlaneseq
    %v930 = vshrl.u32 %v929, 7
    %v931 = vsub.s32 %v928, %v930
    %v932 = vrot.slane %v924, %v931
    %v934 = vunpack.c.l.s4 1934713408
    %v935 = vunpack.c.0.s8 %v934
    %v936 = vlaneseq
    %v937 = vshrl.u32 %v936, 7
    %v938 = vsub.s32 %v935, %v937
    %v939 = vrot.slane %v925, %v938
    %v940 = vcombine.low %v915, %v923
    %v941 = vcombine.high %v915, %v923
    %v943 = vunpack.c.l.s4 1934713408
    %v944 = vunpack.c.0.s8 %v943
    %v945 = vlaneseq
    %v946 = vshrl.u32 %v945, 7
    %v947 = vsub.s32 %v944, %v946
    %v948 = vrot.slane %v940, %v947
    %v950 = vunpack.c.l.s4 1934713408
    %v951 = vunpack.c.0.s8 %v950
    %v952 = vlaneseq
    %v953 = vshrl.u32 %v952, 7
    %v954 = vsub.s32 %v951, %v953
    %v955 = vrot.slane %v941, %v954
    %v956 = vcombine.low %v932, %v948
    %v957 = vcombine.high %v932, %v948
    %v958 = vcombine.low %v939, %v955
    %v959 = vcombine.high %v939, %v955
    %v960 = vcombine.low %v864, %v871
    %v962 = vunpack.c.l.s4 1983009808
    %v963 = vunpack.c.0.s8 %v962
    %v964 = vlaneseq
    %v965 = vshrl.u32 %v964, 7
    %v966 = vsub.s32 %v963, %v965
    %v967 = vrot.slane %v960, %v966
    %v968 = vcombine.low %v888, %v889
    %v970 = vunpack.c.l.s4 1983009808
    %v971 = vunpack.c.0.s8 %v970
    %v972 = vlaneseq
    %v973 = vshrl.u32 %v972, 7
    %v974 = vsub.s32 %v971, %v973
    %v975 = vrot.slane %v968, %v974
    %v976 = vcombine.low %v880, %v887
    %v978 = vunpack.c.l.s4 1983009808
    %v979 = vunpack.c.0.s8 %v978
    %v980 = vlaneseq
    %v981 = vshrl.u32 %v980, 7
    %v982 = vsub.s32 %v979, %v981
    %v983 = vrot.slane %v976, %v982
    %v984 = vcombine.low %v890, %v891
    %v986 = vunpack.c.l.s4 1983009808
    %v987 = vunpack.c.0.s8 %v986
    %v988 = vlaneseq
    %v989 = vshrl.u32 %v988, 7
    %v990 = vsub.s32 %v987, %v989
    %v991 = vrot.slane %v984, %v990
    %v992 = vcombine.low %v967, %v975
    %v993 = vcombine.high %v967, %v975
    %v995 = vunpack.c.l.s4 1934713408
    %v996 = vunpack.c.0.s8 %v995
    %v997 = vlaneseq
    %v998 = vshrl.u32 %v997, 7
    %v999 = vsub.s32 %v996, %v998
    %v1000 = vrot.slane %v992, %v999
    %v1002 = vunpack.c.l.s4 1934713408
    %v1003 = vunpack.c.0.s8 %v1002
    %v1004 = vlaneseq
    %v1005 = vshrl.u32 %v1004, 7
    %v1006 = vsub.s32 %v1003, %v1005
    %v1007 = vrot.slane %v993, %v1006
    %v1008 = vcombine.low %v983, %v991
    %v1009 = vcombine.high %v983, %v991
    %v1011 = vunpack.c.l.s4 1934713408
    %v1012 = vunpack.c.0.s8 %v1011
    %v1013 = vlaneseq
    %v1014 = vshrl.u32 %v1013, 7
    %v1015 = vsub.s32 %v1012, %v1014
    %v1016 = vrot.slane %v1008, %v1015
    %v1018 = vunpack.c.l.s4 1934713408
    %v1019 = vunpack.c.0.s8 %v1018
    %v1020 = vlaneseq
    %v1021 = vshrl.u32 %v1020, 7
    %v1022 = vsub.s32 %v1019, %v1021
    %v1023 = vrot.slane %v1009, %v1022
    %v1024 = vcombine.low %v1000, %v1016
    %v1025 = vcombine.high %v1000, %v1016
    %v1026 = vcombine.low %v1007, %v1023
    %v1027 = vcombine.high %v1007, %v1023
    %v1028 = vlaneseq
    %v1029 = vshrl.u32 %v1028, 7
    %v1030 = vadd.s32 %v1029, 8
    %v1031 = vshra.s32 %v1029, 3
    %v1032 = vshra.s32 %v1030, 3
    %v1033 = vlaneseq
    %v1034 = vand.u32 %v1033, 127
    %v1035 = vshra.s32 %v1034, 3
    %vm1036 = vcmp.eq.s32.totalorder %v1031, %v1035
    %vm1037 = vcmp.eq.s32.totalorder %v1032, %v1035
    %v1038 = vsel %vm1036, 0.0, -1e+30
    %v1039 = vsel %vm1037, 0.0, -1e+30
    %vm1040 = vcmask 64512
    %v1042 = vsel %vm1040, %v364, 0
    %v1045 = vsel %vm1040, %v432, 0
    %v1048 = vsel %vm1040, %v660, 0
    %v1051 = vsel %vm1040, %v728, 0
    %1053 = vmatprep.subr.mxu0 0.0
    %1054 = vmatpush1.xpose.msra.mxu0 %v1048
    %1055 = vmatprep.subr.mxu0 0.0
    %1056 = vmatpush1.xpose.msra.mxu0 %v1051
    %1057 = vmatprep.subr.mxu0 0.0
    %1058 = vmatpush1.xpose.msra.mxu0 0.0
    %1059 = vmatprep.subr.mxu0 0.0
    %1060 = vmatpush1.xpose.msra.mxu0 0.0
    %1061 = vmatprep.subr.mxu0 0.0
    %1062 = vmatpush1.xpose.msra.mxu0 0.0
    %1063 = vmatprep.subr.mxu0 0.0
    %1064 = vmatpush1.xpose.msra.mxu0 0.0
    %1065 = vmatprep.subr.mxu0 0.0
    %1066 = vmatpush1.xpose.msra.mxu0 0.0
    %1067 = vmatprep.subr.mxu0 0.0
    %1068 = vmatpush1.xpose.msra.mxu0 0.0
    %1069 = vmatprep.subr.mxu0 0.0
    %1070 = vmatpush1.xpose.msra.mxu0 0.0
    %1071 = vmatprep.subr.mxu0 0.0
    %1072 = vmatpush1.xpose.msra.mxu0 0.0
    %1073 = vmatprep.subr.mxu0 0.0
    %1074 = vmatpush1.xpose.msra.mxu0 0.0
    %1075 = vmatprep.subr.mxu0 0.0
    %1076 = vmatpush1.xpose.msra.mxu0 0.0
    %1077 = vmatprep.subr.mxu0 0.0
    %1078 = vmatpush1.xpose.msra.mxu0 0.0
    %1079 = vmatprep.subr.mxu0 0.0
    %1080 = vmatpush1.xpose.msra.mxu0 0.0
    %1081 = vmatprep.subr.mxu0 0.0
    %1082 = vmatpush1.xpose.msra.mxu0 0.0
    %1083 = vmatprep.subr.mxu0 0.0
    %1084 = vmatpush1.xpose.msra.mxu0 0.0
    %1085 = vmatprep.subr.mxu0 0.0
    %1086 = vmatpush1.xpose.msra.mxu0 0.0
    %1087 = vmatprep.subr.mxu0 0.0
    %1088 = vmatpush1.xpose.msra.mxu0 0.0
    %1089 = vmatprep.subr.mxu0 0.0
    %1090 = vmatpush1.xpose.msra.mxu0 0.0
    %1091 = vmatprep.subr.mxu0 0.0
    %1092 = vmatpush1.xpose.msra.mxu0 0.0
    %1093 = vmatprep.subr.mxu0 0.0
    %1094 = vmatpush1.xpose.msra.mxu0 0.0
    %1095 = vmatprep.subr.mxu0 0.0
    %1096 = vmatpush1.xpose.msra.mxu0 0.0
    %1097 = vmatprep.subr.mxu0 0.0
    %1098 = vmatpush1.xpose.msra.mxu0 0.0
    %1099 = vmatprep.subr.mxu0 0.0
    %1100 = vmatpush1.xpose.msra.mxu0 0.0
    %1101 = vmatprep.subr.mxu0 0.0
    %1102 = vmatpush1.xpose.msra.mxu0 0.0
    %1103 = vmatprep.subr.mxu0 0.0
    %1104 = vmatpush1.xpose.msra.mxu0 0.0
    %1105 = vmatprep.subr.mxu0 0.0
    %1106 = vmatpush1.xpose.msra.mxu0 0.0
    %1107 = vmatprep.subr.mxu0 0.0
    %1108 = vmatpush1.xpose.msra.mxu0 0.0
    %1109 = vmatprep.subr.mxu0 0.0
    %1110 = vmatpush1.xpose.msra.mxu0 0.0
    %1111 = vmatprep.subr.mxu0 0.0
    %1112 = vmatpush1.xpose.msra.mxu0 0.0
    %1113 = vmatprep.subr.mxu0 0.0
    %1114 = vmatpush1.xpose.msra.mxu0 0.0
    %1115 = vmatprep.subr.mxu0 0.0
    %1116 = vmatpush1.xpose.msra.mxu0 0.0
    %1117 = vmatprep.mubr.f32.mxu0 0.0
    %1118 = vmatmul.mubr.f32.gmra.mrb[0].mxu0 %v1042
    %v1119 = vpop.f32.mrb[0].mxu0
    %v1120 = vadd.f32 %v1038, %v1119
    %v1121 = vpop.f32.mrb[0].mxu0
    %1122 = vmatprep.mubr.f32.mxu0 0.0
    %1123 = vmatmul.mubr.f32.gmra.mrb[0].mxu0 %v1045
    %v1124 = vpop.f32.mrb[0].mxu0
    %v1125 = vadd.f32 %v1039, %v1124
    %v1126 = vpop.f32.mrb[0].mxu0
    %1127 = vdwg.mxu0
    %v1129 = vsel %vm1040, %v365, 0
    %v1132 = vsel %vm1040, %v433, 0
    %v1135 = vsel %vm1040, %v661, 0
    %v1138 = vsel %vm1040, %v729, 0
    %1140 = vmatprep.subr.mxu0 0.0
    %1141 = vmatpush1.xpose.msra.mxu0 %v1135
    %1142 = vmatprep.subr.mxu0 0.0
    %1143 = vmatpush1.xpose.msra.mxu0 %v1138
    %1144 = vmatprep.subr.mxu0 0.0
    %1145 = vmatpush1.xpose.msra.mxu0 0.0
    %1146 = vmatprep.subr.mxu0 0.0
    %1147 = vmatpush1.xpose.msra.mxu0 0.0
    %1148 = vmatprep.subr.mxu0 0.0
    %1149 = vmatpush1.xpose.msra.mxu0 0.0
    %1150 = vmatprep.subr.mxu0 0.0
    %1151 = vmatpush1.xpose.msra.mxu0 0.0
    %1152 = vmatprep.subr.mxu0 0.0
    %1153 = vmatpush1.xpose.msra.mxu0 0.0
    %1154 = vmatprep.subr.mxu0 0.0
    %1155 = vmatpush1.xpose.msra.mxu0 0.0
    %1156 = vmatprep.subr.mxu0 0.0
    %1157 = vmatpush1.xpose.msra.mxu0 0.0
    %1158 = vmatprep.subr.mxu0 0.0
    %1159 = vmatpush1.xpose.msra.mxu0 0.0
    %1160 = vmatprep.subr.mxu0 0.0
    %1161 = vmatpush1.xpose.msra.mxu0 0.0
    %1162 = vmatprep.subr.mxu0 0.0
    %1163 = vmatpush1.xpose.msra.mxu0 0.0
    %1164 = vmatprep.subr.mxu0 0.0
    %1165 = vmatpush1.xpose.msra.mxu0 0.0
    %1166 = vmatprep.subr.mxu0 0.0
    %1167 = vmatpush1.xpose.msra.mxu0 0.0
    %1168 = vmatprep.subr.mxu0 0.0
    %1169 = vmatpush1.xpose.msra.mxu0 0.0
    %1170 = vmatprep.subr.mxu0 0.0
    %1171 = vmatpush1.xpose.msra.mxu0 0.0
    %1172 = vmatprep.subr.mxu0 0.0
    %1173 = vmatpush1.xpose.msra.mxu0 0.0
    %1174 = vmatprep.subr.mxu0 0.0
    %1175 = vmatpush1.xpose.msra.mxu0 0.0
    %1176 = vmatprep.subr.mxu0 0.0
    %1177 = vmatpush1.xpose.msra.mxu0 0.0
    %1178 = vmatprep.subr.mxu0 0.0
    %1179 = vmatpush1.xpose.msra.mxu0 0.0
    %1180 = vmatprep.subr.mxu0 0.0
    %1181 = vmatpush1.xpose.msra.mxu0 0.0
    %1182 = vmatprep.subr.mxu0 0.0
    %1183 = vmatpush1.xpose.msra.mxu0 0.0
    %1184 = vmatprep.subr.mxu0 0.0
    %1185 = vmatpush1.xpose.msra.mxu0 0.0
    %1186 = vmatprep.subr.mxu0 0.0
    %1187 = vmatpush1.xpose.msra.mxu0 0.0
    %1188 = vmatprep.subr.mxu0 0.0
    %1189 = vmatpush1.xpose.msra.mxu0 0.0
    %1190 = vmatprep.subr.mxu0 0.0
    %1191 = vmatpush1.xpose.msra.mxu0 0.0
    %1192 = vmatprep.subr.mxu0 0.0
    %1193 = vmatpush1.xpose.msra.mxu0 0.0
    %1194 = vmatprep.subr.mxu0 0.0
    %1195 = vmatpush1.xpose.msra.mxu0 0.0
    %1196 = vmatprep.subr.mxu0 0.0
    %1197 = vmatpush1.xpose.msra.mxu0 0.0
    %1198 = vmatprep.subr.mxu0 0.0
    %1199 = vmatpush1.xpose.msra.mxu0 0.0
    %1200 = vmatprep.subr.mxu0 0.0
    %1201 = vmatpush1.xpose.msra.mxu0 0.0
    %1202 = vmatprep.subr.mxu0 0.0
    %1203 = vmatpush1.xpose.msra.mxu0 0.0
    %1204 = vmatprep.mubr.f32.mxu0 0.0
    %1205 = vmatmul.mubr.f32.gmra.mrb[0].mxu0 %v1129
    %v1206 = vpop.f32.mrb[0].mxu0
    %v1207 = vadd.f32 %v1038, %v1206
    %v1208 = vpop.f32.mrb[0].mxu0
    %1209 = vmatprep.mubr.f32.mxu0 0.0
    %1210 = vmatmul.mubr.f32.gmra.mrb[0].mxu0 %v1132
    %v1211 = vpop.f32.mrb[0].mxu0
    %v1212 = vadd.f32 %v1039, %v1211
    %v1213 = vpop.f32.mrb[0].mxu0
    %1214 = vdwg.mxu0
    %v1216 = vsel %vm1040, %v366, 0
    %v1219 = vsel %vm1040, %v434, 0
    %v1222 = vsel %vm1040, %v662, 0
    %v1225 = vsel %vm1040, %v730, 0
    %1227 = vmatprep.subr.mxu0 0.0
    %1228 = vmatpush1.xpose.msra.mxu0 %v1222
    %1229 = vmatprep.subr.mxu0 0.0
    %1230 = vmatpush1.xpose.msra.mxu0 %v1225
    %1231 = vmatprep.subr.mxu0 0.0
    %1232 = vmatpush1.xpose.msra.mxu0 0.0
    %1233 = vmatprep.subr.mxu0 0.0
    %1234 = vmatpush1.xpose.msra.mxu0 0.0
    %1235 = vmatprep.subr.mxu0 0.0
    %1236 = vmatpush1.xpose.msra.mxu0 0.0
    %1237 = vmatprep.subr.mxu0 0.0
    %1238 = vmatpush1.xpose.msra.mxu0 0.0
    %1239 = vmatprep.subr.mxu0 0.0
    %1240 = vmatpush1.xpose.msra.mxu0 0.0
    %1241 = vmatprep.subr.mxu0 0.0
    %1242 = vmatpush1.xpose.msra.mxu0 0.0
    %1243 = vmatprep.subr.mxu0 0.0
    %1244 = vmatpush1.xpose.msra.mxu0 0.0
    %1245 = vmatprep.subr.mxu0 0.0
    %1246 = vmatpush1.xpose.msra.mxu0 0.0
    %1247 = vmatprep.subr.mxu0 0.0
    %1248 = vmatpush1.xpose.msra.mxu0 0.0
    %1249 = vmatprep.subr.mxu0 0.0
    %1250 = vmatpush1.xpose.msra.mxu0 0.0
    %1251 = vmatprep.subr.mxu0 0.0
    %1252 = vmatpush1.xpose.msra.mxu0 0.0
    %1253 = vmatprep.subr.mxu0 0.0
    %1254 = vmatpush1.xpose.msra.mxu0 0.0
    %1255 = vmatprep.subr.mxu0 0.0
    %1256 = vmatpush1.xpose.msra.mxu0 0.0
    %1257 = vmatprep.subr.mxu0 0.0
    %1258 = vmatpush1.xpose.msra.mxu0 0.0
    %1259 = vmatprep.subr.mxu0 0.0
    %1260 = vmatpush1.xpose.msra.mxu0 0.0
    %1261 = vmatprep.subr.mxu0 0.0
    %1262 = vmatpush1.xpose.msra.mxu0 0.0
    %1263 = vmatprep.subr.mxu0 0.0
    %1264 = vmatpush1.xpose.msra.mxu0 0.0
    %1265 = vmatprep.subr.mxu0 0.0
    %1266 = vmatpush1.xpose.msra.mxu0 0.0
    %1267 = vmatprep.subr.mxu0 0.0
    %1268 = vmatpush1.xpose.msra.mxu0 0.0
    %1269 = vmatprep.subr.mxu0 0.0
    %1270 = vmatpush1.xpose.msra.mxu0 0.0
    %1271 = vmatprep.subr.mxu0 0.0
    %1272 = vmatpush1.xpose.msra.mxu0 0.0
    %1273 = vmatprep.subr.mxu0 0.0
    %1274 = vmatpush1.xpose.msra.mxu0 0.0
    %1275 = vmatprep.subr.mxu0 0.0
    %1276 = vmatpush1.xpose.msra.mxu0 0.0
    %1277 = vmatprep.subr.mxu0 0.0
    %1278 = vmatpush1.xpose.msra.mxu0 0.0
    %1279 = vmatprep.subr.mxu0 0.0
    %1280 = vmatpush1.xpose.msra.mxu0 0.0
    %1281 = vmatprep.subr.mxu0 0.0
    %1282 = vmatpush1.xpose.msra.mxu0 0.0
    %1283 = vmatprep.subr.mxu0 0.0
    %1284 = vmatpush1.xpose.msra.mxu0 0.0
    %1285 = vmatprep.subr.mxu0 0.0
    %1286 = vmatpush1.xpose.msra.mxu0 0.0
    %1287 = vmatprep.subr.mxu0 0.0
    %1288 = vmatpush1.xpose.msra.mxu0 0.0
    %1289 = vmatprep.subr.mxu0 0.0
    %1290 = vmatpush1.xpose.msra.mxu0 0.0
    %1291 = vmatprep.mubr.f32.mxu0 0.0
    %1292 = vmatmul.mubr.f32.gmra.mrb[0].mxu0 %v1216
    %v1293 = vpop.f32.mrb[0].mxu0
    %v1294 = vadd.f32 %v1038, %v1293
    %v1295 = vpop.f32.mrb[0].mxu0
    %1296 = vmatprep.mubr.f32.mxu0 0.0
    %1297 = vmatmul.mubr.f32.gmra.mrb[0].mxu0 %v1219
    %v1298 = vpop.f32.mrb[0].mxu0
    %v1299 = vadd.f32 %v1039, %v1298
    %v1300 = vpop.f32.mrb[0].mxu0
    %1301 = vdwg.mxu0
    %v1303 = vsel %vm1040, %v367, 0
    %v1306 = vsel %vm1040, %v435, 0
    %v1309 = vsel %vm1040, %v663, 0
    %v1312 = vsel %vm1040, %v731, 0
    %1314 = vmatprep.subr.mxu0 0.0
    %1315 = vmatpush1.xpose.msra.mxu0 %v1309
    %1316 = vmatprep.subr.mxu0 0.0
    %1317 = vmatpush1.xpose.msra.mxu0 %v1312
    %1318 = vmatprep.subr.mxu0 0.0
    %1319 = vmatpush1.xpose.msra.mxu0 0.0
    %1320 = vmatprep.subr.mxu0 0.0
    %1321 = vmatpush1.xpose.msra.mxu0 0.0
    %1322 = vmatprep.subr.mxu0 0.0
    %1323 = vmatpush1.xpose.msra.mxu0 0.0
    %1324 = vmatprep.subr.mxu0 0.0
    %1325 = vmatpush1.xpose.msra.mxu0 0.0
    %1326 = vmatprep.subr.mxu0 0.0
    %1327 = vmatpush1.xpose.msra.mxu0 0.0
    %1328 = vmatprep.subr.mxu0 0.0
    %1329 = vmatpush1.xpose.msra.mxu0 0.0
    %1330 = vmatprep.subr.mxu0 0.0
    %1331 = vmatpush1.xpose.msra.mxu0 0.0
    %1332 = vmatprep.subr.mxu0 0.0
    %1333 = vmatpush1.xpose.msra.mxu0 0.0
    %1334 = vmatprep.subr.mxu0 0.0
    %1335 = vmatpush1.xpose.msra.mxu0 0.0
    %1336 = vmatprep.subr.mxu0 0.0
    %1337 = vmatpush1.xpose.msra.mxu0 0.0
    %1338 = vmatprep.subr.mxu0 0.0
    %1339 = vmatpush1.xpose.msra.mxu0 0.0
    %1340 = vmatprep.subr.mxu0 0.0
    %1341 = vmatpush1.xpose.msra.mxu0 0.0
    %1342 = vmatprep.subr.mxu0 0.0
    %1343 = vmatpush1.xpose.msra.mxu0 0.0
    %1344 = vmatprep.subr.mxu0 0.0
    %1345 = vmatpush1.xpose.msra.mxu0 0.0
    %1346 = vmatprep.subr.mxu0 0.0
    %1347 = vmatpush1.xpose.msra.mxu0 0.0
    %1348 = vmatprep.subr.mxu0 0.0
    %1349 = vmatpush1.xpose.msra.mxu0 0.0
    %1350 = vmatprep.subr.mxu0 0.0
    %1351 = vmatpush1.xpose.msra.mxu0 0.0
    %1352 = vmatprep.subr.mxu0 0.0
    %1353 = vmatpush1.xpose.msra.mxu0 0.0
    %1354 = vmatprep.subr.mxu0 0.0
    %1355 = vmatpush1.xpose.msra.mxu0 0.0
    %1356 = vmatprep.subr.mxu0 0.0
    %1357 = vmatpush1.xpose.msra.mxu0 0.0
    %1358 = vmatprep.subr.mxu0 0.0
    %1359 = vmatpush1.xpose.msra.mxu0 0.0
    %1360 = vmatprep.subr.mxu0 0.0
    %1361 = vmatpush1.xpose.msra.mxu0 0.0
    %1362 = vmatprep.subr.mxu0 0.0
    %1363 = vmatpush1.xpose.msra.mxu0 0.0
    %1364 = vmatprep.subr.mxu0 0.0
    %1365 = vmatpush1.xpose.msra.mxu0 0.0
    %1366 = vmatprep.subr.mxu0 0.0
    %1367 = vmatpush1.xpose.msra.mxu0 0.0
    %1368 = vmatprep.subr.mxu0 0.0
    %1369 = vmatpush1.xpose.msra.mxu0 0.0
    %1370 = vmatprep.subr.mxu0 0.0
    %1371 = vmatpush1.xpose.msra.mxu0 0.0
    %1372 = vmatprep.subr.mxu0 0.0
    %1373 = vmatpush1.xpose.msra.mxu0 0.0
    %1374 = vmatprep.subr.mxu0 0.0
    %1375 = vmatpush1.xpose.msra.mxu0 0.0
    %1376 = vmatprep.subr.mxu0 0.0
    %1377 = vmatpush1.xpose.msra.mxu0 0.0
    %1378 = vmatprep.mubr.f32.mxu0 0.0
    %1379 = vmatmul.mubr.f32.gmra.mrb[0].mxu0 %v1303
    %v1380 = vpop.f32.mrb[0].mxu0
    %v1381 = vadd.f32 %v1038, %v1380
    %v1382 = vpop.f32.mrb[0].mxu0
    %1383 = vmatprep.mubr.f32.mxu0 0.0
    %1384 = vmatmul.mubr.f32.gmra.mrb[0].mxu0 %v1306
    %v1385 = vpop.f32.mrb[0].mxu0
    %v1386 = vadd.f32 %v1039, %v1385
    %v1387 = vpop.f32.mrb[0].mxu0
    %1388 = vdwg.mxu0
    %vm1389 = vcmask 130048
    %v1390 = vsel %vm1389, %v1120, -inf
    %1391 = vmax.xlane.f32.xlu0 %v1390
    %v1392 = vpop.xlane.xlu0 %1391
    %v1393 = vsel %vm1389, %v1125, -inf
    %1394 = vmax.xlane.f32.xlu0 %v1393
    %v1395 = vpop.xlane.xlu0 %1394
    %v1396 = vsel %vm1389, %v1207, -inf
    %1397 = vmax.xlane.f32.xlu0 %v1396
    %v1398 = vpop.xlane.xlu0 %1397
    %v1399 = vsel %vm1389, %v1212, -inf
    %1400 = vmax.xlane.f32.xlu0 %v1399
    %v1401 = vpop.xlane.xlu0 %1400
    %v1402 = vsel %vm1389, %v1294, -inf
    %1403 = vmax.xlane.f32.xlu0 %v1402
    %v1404 = vpop.xlane.xlu0 %1403
    %v1405 = vsel %vm1389, %v1299, -inf
    %1406 = vmax.xlane.f32.xlu0 %v1405
    %v1407 = vpop.xlane.xlu0 %1406
    %v1408 = vsel %vm1389, %v1381, -inf
    %1409 = vmax.xlane.f32.xlu0 %v1408
    %v1410 = vpop.xlane.xlu0 %1409
    %v1411 = vsel %vm1389, %v1386, -inf
    %1412 = vmax.xlane.f32.xlu0 %v1411
    %v1413 = vpop.xlane.xlu0 %1412
    %v1414 = vsub.f32 %v1120, %v1392
    %v1415 = vsub.f32 %v1125, %v1395
    %v1416 = vsub.f32 %v1207, %v1398
    %v1417 = vsub.f32 %v1212, %v1401
    %v1418 = vsub.f32 %v1294, %v1404
    %v1419 = vsub.f32 %v1299, %v1407
    %v1420 = vsub.f32 %v1381, %v1410
    %v1421 = vsub.f32 %v1386, %v1413
    %v1422 = vmul.f32 %v1414, 1.442695
    %v1423 = vpow.pop %v1422
    %v1424 = vmul.f32 %v1415, 1.442695
    %v1425 = vpow.pop %v1424
    %v1426 = vmul.f32 %v1416, 1.442695
    %v1427 = vpow.pop %v1426
    %v1428 = vmul.f32 %v1417, 1.442695
    %v1429 = vpow.pop %v1428
    %v1430 = vmul.f32 %v1418, 1.442695
    %v1431 = vpow.pop %v1430
    %v1432 = vmul.f32 %v1419, 1.442695
    %v1433 = vpow.pop %v1432
    %v1434 = vmul.f32 %v1420, 1.442695
    %v1435 = vpow.pop %v1434
    %v1436 = vmul.f32 %v1421, 1.442695
    %v1437 = vpow.pop %v1436
    %v1438 = vsel %vm1389, %v1423, 0.0
    %1439 = vadd.xlane.f32.xlu0 %v1438
    %v1440 = vpop.xlane.xlu0 %1439
    %v1441 = vsel %vm1389, %v1425, 0.0
    %1442 = vadd.xlane.f32.xlu0 %v1441
    %v1443 = vpop.xlane.xlu0 %1442
    %v1444 = vsel %vm1389, %v1427, 0.0
    %1445 = vadd.xlane.f32.xlu0 %v1444
    %v1446 = vpop.xlane.xlu0 %1445
    %v1447 = vsel %vm1389, %v1429, 0.0
    %1448 = vadd.xlane.f32.xlu0 %v1447
    %v1449 = vpop.xlane.xlu0 %1448
    %v1450 = vsel %vm1389, %v1431, 0.0
    %1451 = vadd.xlane.f32.xlu0 %v1450
    %v1452 = vpop.xlane.xlu0 %1451
    %v1453 = vsel %vm1389, %v1433, 0.0
    %1454 = vadd.xlane.f32.xlu0 %v1453
    %v1455 = vpop.xlane.xlu0 %1454
    %v1456 = vsel %vm1389, %v1435, 0.0
    %1457 = vadd.xlane.f32.xlu0 %v1456
    %v1458 = vpop.xlane.xlu0 %1457
    %v1459 = vsel %vm1389, %v1437, 0.0
    %1460 = vadd.xlane.f32.xlu0 %v1459
    %v1461 = vpop.xlane.xlu0 %1460
    %v1462 = vrcp.pop %v1440
    %v1463 = vmul.f32 %v1423, %v1462
    %v1464 = vrcp.pop %v1443
    %v1465 = vmul.f32 %v1425, %v1464
    %v1466 = vrcp.pop %v1446
    %v1467 = vmul.f32 %v1427, %v1466
    %v1468 = vrcp.pop %v1449
    %v1469 = vmul.f32 %v1429, %v1468
    %v1470 = vrcp.pop %v1452
    %v1471 = vmul.f32 %v1431, %v1470
    %v1472 = vrcp.pop %v1455
    %v1473 = vmul.f32 %v1433, %v1472
    %v1474 = vrcp.pop %v1458
    %v1475 = vmul.f32 %v1435, %v1474
    %v1476 = vrcp.pop %v1461
    %v1477 = vmul.f32 %v1437, %v1476
    %v1479 = vsel %vm1389, %v1463, 0
    %v1482 = vsel %vm1389, %v1465, 0
    %1484 = vmatprep.subr.mxu0 0.0
    %1485 = vmatpush1.msra.mxu0 %v956
    %1486 = vmatprep.subr.mxu0 0.0
    %1487 = vmatpush1.msra.mxu0 %v1024
    %1488 = vmatprep.subr.mxu0 0.0
    %1489 = vmatpush1.msra.mxu0 0.0
    %1490 = vmatprep.subr.mxu0 0.0
    %1491 = vmatpush1.msra.mxu0 0.0
    %1492 = vmatprep.subr.mxu0 0.0
    %1493 = vmatpush1.msra.mxu0 0.0
    %1494 = vmatprep.subr.mxu0 0.0
    %1495 = vmatpush1.msra.mxu0 0.0
    %1496 = vmatprep.subr.mxu0 0.0
    %1497 = vmatpush1.msra.mxu0 0.0
    %1498 = vmatprep.subr.mxu0 0.0
    %1499 = vmatpush1.msra.mxu0 0.0
    %1500 = vmatprep.subr.mxu0 0.0
    %1501 = vmatpush1.msra.mxu0 0.0
    %1502 = vmatprep.subr.mxu0 0.0
    %1503 = vmatpush1.msra.mxu0 0.0
    %1504 = vmatprep.subr.mxu0 0.0
    %1505 = vmatpush1.msra.mxu0 0.0
    %1506 = vmatprep.subr.mxu0 0.0
    %1507 = vmatpush1.msra.mxu0 0.0
    %1508 = vmatprep.subr.mxu0 0.0
    %1509 = vmatpush1.msra.mxu0 0.0
    %1510 = vmatprep.subr.mxu0 0.0
    %1511 = vmatpush1.msra.mxu0 0.0
    %1512 = vmatprep.subr.mxu0 0.0
    %1513 = vmatpush1.msra.mxu0 0.0
    %1514 = vmatprep.subr.mxu0 0.0
    %1515 = vmatpush1.msra.mxu0 0.0
    %1516 = vmatprep.subr.mxu0 0.0
    %1517 = vmatpush1.msra.mxu0 0.0
    %1518 = vmatprep.subr.mxu0 0.0
    %1519 = vmatpush1.msra.mxu0 0.0
    %1520 = vmatprep.subr.mxu0 0.0
    %1521 = vmatpush1.msra.mxu0 0.0
    %1522 = vmatprep.subr.mxu0 0.0
    %1523 = vmatpush1.msra.mxu0 0.0
    %1524 = vmatprep.subr.mxu0 0.0
    %1525 = vmatpush1.msra.mxu0 0.0
    %1526 = vmatprep.subr.mxu0 0.0
    %1527 = vmatpush1.msra.mxu0 0.0
    %1528 = vmatprep.subr.mxu0 0.0
    %1529 = vmatpush1.msra.mxu0 0.0
    %1530 = vmatprep.subr.mxu0 0.0
    %1531 = vmatpush1.msra.mxu0 0.0
    %1532 = vmatprep.subr.mxu0 0.0
    %1533 = vmatpush1.msra.mxu0 0.0
    %1534 = vmatprep.subr.mxu0 0.0
    %1535 = vmatpush1.msra.mxu0 0.0
    %1536 = vmatprep.subr.mxu0 0.0
    %1537 = vmatpush1.msra.mxu0 0.0
    %1538 = vmatprep.subr.mxu0 0.0
    %1539 = vmatpush1.msra.mxu0 0.0
    %1540 = vmatprep.subr.mxu0 0.0
    %1541 = vmatpush1.msra.mxu0 0.0
    %1542 = vmatprep.subr.mxu0 0.0
    %1543 = vmatpush1.msra.mxu0 0.0
    %1544 = vmatprep.subr.mxu0 0.0
    %1545 = vmatpush1.msra.mxu0 0.0
    %1546 = vmatprep.subr.mxu0 0.0
    %1547 = vmatpush1.msra.mxu0 0.0
    %1548 = vmatprep.mubr.f32.mxu0 0.0
    %1549 = vmatmul.mubr.f32.gmra.mrb[0].mxu0 %v1479
    %v1550 = vpop.f32.mrb[0].mxu0
    %v1551 = vadd.f32 0.0, %v1550
    %v1552 = vpop.f32.mrb[0].mxu0
    %1553 = vmatprep.mubr.f32.mxu0 0.0
    %1554 = vmatmul.mubr.f32.gmra.mrb[0].mxu0 %v1482
    %v1555 = vpop.f32.mrb[0].mxu0
    %v1556 = vadd.f32 0.0, %v1555
    %v1557 = vpop.f32.mrb[0].mxu0
    %1558 = vdwg.mxu0
    %v1560 = vsel %vm1389, %v1467, 0
    %v1563 = vsel %vm1389, %v1469, 0
    %1565 = vmatprep.subr.mxu0 0.0
    %1566 = vmatpush1.msra.mxu0 %v957
    %1567 = vmatprep.subr.mxu0 0.0
    %1568 = vmatpush1.msra.mxu0 %v1025
    %1569 = vmatprep.subr.mxu0 0.0
    %1570 = vmatpush1.msra.mxu0 0.0
    %1571 = vmatprep.subr.mxu0 0.0
    %1572 = vmatpush1.msra.mxu0 0.0
    %1573 = vmatprep.subr.mxu0 0.0
    %1574 = vmatpush1.msra.mxu0 0.0
    %1575 = vmatprep.subr.mxu0 0.0
    %1576 = vmatpush1.msra.mxu0 0.0
    %1577 = vmatprep.subr.mxu0 0.0
    %1578 = vmatpush1.msra.mxu0 0.0
    %1579 = vmatprep.subr.mxu0 0.0
    %1580 = vmatpush1.msra.mxu0 0.0
    %1581 = vmatprep.subr.mxu0 0.0
    %1582 = vmatpush1.msra.mxu0 0.0
    %1583 = vmatprep.subr.mxu0 0.0
    %1584 = vmatpush1.msra.mxu0 0.0
    %1585 = vmatprep.subr.mxu0 0.0
    %1586 = vmatpush1.msra.mxu0 0.0
    %1587 = vmatprep.subr.mxu0 0.0
    %1588 = vmatpush1.msra.mxu0 0.0
    %1589 = vmatprep.subr.mxu0 0.0
    %1590 = vmatpush1.msra.mxu0 0.0
    %1591 = vmatprep.subr.mxu0 0.0
    %1592 = vmatpush1.msra.mxu0 0.0
    %1593 = vmatprep.subr.mxu0 0.0
    %1594 = vmatpush1.msra.mxu0 0.0
    %1595 = vmatprep.subr.mxu0 0.0
    %1596 = vmatpush1.msra.mxu0 0.0
    %1597 = vmatprep.subr.mxu0 0.0
    %1598 = vmatpush1.msra.mxu0 0.0
    %1599 = vmatprep.subr.mxu0 0.0
    %1600 = vmatpush1.msra.mxu0 0.0
    %1601 = vmatprep.subr.mxu0 0.0
    %1602 = vmatpush1.msra.mxu0 0.0
    %1603 = vmatprep.subr.mxu0 0.0
    %1604 = vmatpush1.msra.mxu0 0.0
    %1605 = vmatprep.subr.mxu0 0.0
    %1606 = vmatpush1.msra.mxu0 0.0
    %1607 = vmatprep.subr.mxu0 0.0
    %1608 = vmatpush1.msra.mxu0 0.0
    %1609 = vmatprep.subr.mxu0 0.0
    %1610 = vmatpush1.msra.mxu0 0.0
    %1611 = vmatprep.subr.mxu0 0.0
    %1612 = vmatpush1.msra.mxu0 0.0
    %1613 = vmatprep.subr.mxu0 0.0
    %1614 = vmatpush1.msra.mxu0 0.0
    %1615 = vmatprep.subr.mxu0 0.0
    %1616 = vmatpush1.msra.mxu0 0.0
    %1617 = vmatprep.subr.mxu0 0.0
    %1618 = vmatpush1.msra.mxu0 0.0
    %1619 = vmatprep.subr.mxu0 0.0
    %1620 = vmatpush1.msra.mxu0 0.0
    %1621 = vmatprep.subr.mxu0 0.0
    %1622 = vmatpush1.msra.mxu0 0.0
    %1623 = vmatprep.subr.mxu0 0.0
    %1624 = vmatpush1.msra.mxu0 0.0
    %1625 = vmatprep.subr.mxu0 0.0
    %1626 = vmatpush1.msra.mxu0 0.0
    %1627 = vmatprep.subr.mxu0 0.0
    %1628 = vmatpush1.msra.mxu0 0.0
    %1629 = vmatprep.mubr.f32.mxu0 0.0
    %1630 = vmatmul.mubr.f32.gmra.mrb[0].mxu0 %v1560
    %v1631 = vpop.f32.mrb[0].mxu0
    %v1632 = vadd.f32 0.0, %v1631
    %v1633 = vpop.f32.mrb[0].mxu0
    %1634 = vmatprep.mubr.f32.mxu0 0.0
    %1635 = vmatmul.mubr.f32.gmra.mrb[0].mxu0 %v1563
    %v1636 = vpop.f32.mrb[0].mxu0
    %v1637 = vadd.f32 0.0, %v1636
    %v1638 = vpop.f32.mrb[0].mxu0
    %1639 = vdwg.mxu0
    %v1641 = vsel %vm1389, %v1471, 0
    %v1644 = vsel %vm1389, %v1473, 0
    %1646 = vmatprep.subr.mxu0 0.0
    %1647 = vmatpush1.msra.mxu0 %v958
    %1648 = vmatprep.subr.mxu0 0.0
    %1649 = vmatpush1.msra.mxu0 %v1026
    %1650 = vmatprep.subr.mxu0 0.0
    %1651 = vmatpush1.msra.mxu0 0.0
    %1652 = vmatprep.subr.mxu0 0.0
    %1653 = vmatpush1.msra.mxu0 0.0
    %1654 = vmatprep.subr.mxu0 0.0
    %1655 = vmatpush1.msra.mxu0 0.0
    %1656 = vmatprep.subr.mxu0 0.0
    %1657 = vmatpush1.msra.mxu0 0.0
    %1658 = vmatprep.subr.mxu0 0.0
    %1659 = vmatpush1.msra.mxu0 0.0
    %1660 = vmatprep.subr.mxu0 0.0
    %1661 = vmatpush1.msra.mxu0 0.0
    %1662 = vmatprep.subr.mxu0 0.0
    %1663 = vmatpush1.msra.mxu0 0.0
    %1664 = vmatprep.subr.mxu0 0.0
    %1665 = vmatpush1.msra.mxu0 0.0
    %1666 = vmatprep.subr.mxu0 0.0
    %1667 = vmatpush1.msra.mxu0 0.0
    %1668 = vmatprep.subr.mxu0 0.0
    %1669 = vmatpush1.msra.mxu0 0.0
    %1670 = vmatprep.subr.mxu0 0.0
    %1671 = vmatpush1.msra.mxu0 0.0
    %1672 = vmatprep.subr.mxu0 0.0
    %1673 = vmatpush1.msra.mxu0 0.0
    %1674 = vmatprep.subr.mxu0 0.0
    %1675 = vmatpush1.msra.mxu0 0.0
    %1676 = vmatprep.subr.mxu0 0.0
    %1677 = vmatpush1.msra.mxu0 0.0
    %1678 = vmatprep.subr.mxu0 0.0
    %1679 = vmatpush1.msra.mxu0 0.0
    %1680 = vmatprep.subr.mxu0 0.0
    %1681 = vmatpush1.msra.mxu0 0.0
    %1682 = vmatprep.subr.mxu0 0.0
    %1683 = vmatpush1.msra.mxu0 0.0
    %1684 = vmatprep.subr.mxu0 0.0
    %1685 = vmatpush1.msra.mxu0 0.0
    %1686 = vmatprep.subr.mxu0 0.0
    %1687 = vmatpush1.msra.mxu0 0.0
    %1688 = vmatprep.subr.mxu0 0.0
    %1689 = vmatpush1.msra.mxu0 0.0
    %1690 = vmatprep.subr.mxu0 0.0
    %1691 = vmatpush1.msra.mxu0 0.0
    %1692 = vmatprep.subr.mxu0 0.0
    %1693 = vmatpush1.msra.mxu0 0.0
    %1694 = vmatprep.subr.mxu0 0.0
    %1695 = vmatpush1.msra.mxu0 0.0
    %1696 = vmatprep.subr.mxu0 0.0
    %1697 = vmatpush1.msra.mxu0 0.0
    %1698 = vmatprep.subr.mxu0 0.0
    %1699 = vmatpush1.msra.mxu0 0.0
    %1700 = vmatprep.subr.mxu0 0.0
    %1701 = vmatpush1.msra.mxu0 0.0
    %1702 = vmatprep.subr.mxu0 0.0
    %1703 = vmatpush1.msra.mxu0 0.0
    %1704 = vmatprep.subr.mxu0 0.0
    %1705 = vmatpush1.msra.mxu0 0.0
    %1706 = vmatprep.subr.mxu0 0.0
    %1707 = vmatpush1.msra.mxu0 0.0
    %1708 = vmatprep.subr.mxu0 0.0
    %1709 = vmatpush1.msra.mxu0 0.0
    %1710 = vmatprep.mubr.f32.mxu0 0.0
    %1711 = vmatmul.mubr.f32.gmra.mrb[0].mxu0 %v1641
    %v1712 = vpop.f32.mrb[0].mxu0
    %v1713 = vadd.f32 0.0, %v1712
    %v1714 = vpop.f32.mrb[0].mxu0
    %1715 = vmatprep.mubr.f32.mxu0 0.0
    %1716 = vmatmul.mubr.f32.gmra.mrb[0].mxu0 %v1644
    %v1717 = vpop.f32.mrb[0].mxu0
    %v1718 = vadd.f32 0.0, %v1717
    %v1719 = vpop.f32.mrb[0].mxu0
    %1720 = vdwg.mxu0
    %v1722 = vsel %vm1389, %v1475, 0
    %v1725 = vsel %vm1389, %v1477, 0
    %1727 = vmatprep.subr.mxu0 0.0
    %1728 = vmatpush1.msra.mxu0 %v959
    %1729 = vmatprep.subr.mxu0 0.0
    %1730 = vmatpush1.msra.mxu0 %v1027
    %1731 = vmatprep.subr.mxu0 0.0
    %1732 = vmatpush1.msra.mxu0 0.0
    %1733 = vmatprep.subr.mxu0 0.0
    %1734 = vmatpush1.msra.mxu0 0.0
    %1735 = vmatprep.subr.mxu0 0.0
    %1736 = vmatpush1.msra.mxu0 0.0
    %1737 = vmatprep.subr.mxu0 0.0
    %1738 = vmatpush1.msra.mxu0 0.0
    %1739 = vmatprep.subr.mxu0 0.0
    %1740 = vmatpush1.msra.mxu0 0.0
    %1741 = vmatprep.subr.mxu0 0.0
    %1742 = vmatpush1.msra.mxu0 0.0
    %1743 = vmatprep.subr.mxu0 0.0
    %1744 = vmatpush1.msra.mxu0 0.0
    %1745 = vmatprep.subr.mxu0 0.0
    %1746 = vmatpush1.msra.mxu0 0.0
    %1747 = vmatprep.subr.mxu0 0.0
    %1748 = vmatpush1.msra.mxu0 0.0
    %1749 = vmatprep.subr.mxu0 0.0
    %1750 = vmatpush1.msra.mxu0 0.0
    %1751 = vmatprep.subr.mxu0 0.0
    %1752 = vmatpush1.msra.mxu0 0.0
    %1753 = vmatprep.subr.mxu0 0.0
    %1754 = vmatpush1.msra.mxu0 0.0
    %1755 = vmatprep.subr.mxu0 0.0
    %1756 = vmatpush1.msra.mxu0 0.0
    %1757 = vmatprep.subr.mxu0 0.0
    %1758 = vmatpush1.msra.mxu0 0.0
    %1759 = vmatprep.subr.mxu0 0.0
    %1760 = vmatpush1.msra.mxu0 0.0
    %1761 = vmatprep.subr.mxu0 0.0
    %1762 = vmatpush1.msra.mxu0 0.0
    %1763 = vmatprep.subr.mxu0 0.0
    %1764 = vmatpush1.msra.mxu0 0.0
    %1765 = vmatprep.subr.mxu0 0.0
    %1766 = vmatpush1.msra.mxu0 0.0
    %1767 = vmatprep.subr.mxu0 0.0
    %1768 = vmatpush1.msra.mxu0 0.0
    %1769 = vmatprep.subr.mxu0 0.0
    %1770 = vmatpush1.msra.mxu0 0.0
    %1771 = vmatprep.subr.mxu0 0.0
    %1772 = vmatpush1.msra.mxu0 0.0
    %1773 = vmatprep.subr.mxu0 0.0
    %1774 = vmatpush1.msra.mxu0 0.0
    %1775 = vmatprep.subr.mxu0 0.0
    %1776 = vmatpush1.msra.mxu0 0.0
    %1777 = vmatprep.subr.mxu0 0.0
    %1778 = vmatpush1.msra.mxu0 0.0
    %1779 = vmatprep.subr.mxu0 0.0
    %1780 = vmatpush1.msra.mxu0 0.0
    %1781 = vmatprep.subr.mxu0 0.0
    %1782 = vmatpush1.msra.mxu0 0.0
    %1783 = vmatprep.subr.mxu0 0.0
    %1784 = vmatpush1.msra.mxu0 0.0
    %1785 = vmatprep.subr.mxu0 0.0
    %1786 = vmatpush1.msra.mxu0 0.0
    %1787 = vmatprep.subr.mxu0 0.0
    %1788 = vmatpush1.msra.mxu0 0.0
    %1789 = vmatprep.subr.mxu0 0.0
    %1790 = vmatpush1.msra.mxu0 0.0
    %1791 = vmatprep.mubr.f32.mxu0 0.0
    %1792 = vmatmul.mubr.f32.gmra.mrb[0].mxu0 %v1722
    %v1793 = vpop.f32.mrb[0].mxu0
    %v1794 = vadd.f32 0.0, %v1793
    %v1795 = vpop.f32.mrb[0].mxu0
    %1796 = vmatprep.mubr.f32.mxu0 0.0
    %1797 = vmatmul.mubr.f32.gmra.mrb[0].mxu0 %v1725
    %v1798 = vpop.f32.mrb[0].mxu0
    %v1799 = vadd.f32 0.0, %v1798
    %v1800 = vpop.f32.mrb[0].mxu0
    %1801 = vdwg.mxu0
    %v1802 = vcombine.low %v1551, %v1713
    %v1803 = vcombine.high %v1551, %v1713
    %v1805 = vunpack.c.l.s4 1983009808
    %v1806 = vunpack.c.0.s8 %v1805
    %v1807 = vlaneseq
    %v1808 = vshrl.u32 %v1807, 7
    %v1809 = vsub.s32 %v1806, %v1808
    %v1810 = vrot.slane %v1802, %v1809
    %v1812 = vunpack.c.l.s4 1983009808
    %v1813 = vunpack.c.0.s8 %v1812
    %v1814 = vlaneseq
    %v1815 = vshrl.u32 %v1814, 7
    %v1816 = vsub.s32 %v1813, %v1815
    %v1817 = vrot.slane %v1803, %v1816
    %v1818 = vcombine.low %v1632, %v1794
    %v1819 = vcombine.high %v1632, %v1794
    %v1821 = vunpack.c.l.s4 1983009808
    %v1822 = vunpack.c.0.s8 %v1821
    %v1823 = vlaneseq
    %v1824 = vshrl.u32 %v1823, 7
    %v1825 = vsub.s32 %v1822, %v1824
    %v1826 = vrot.slane %v1818, %v1825
    %v1828 = vunpack.c.l.s4 1983009808
    %v1829 = vunpack.c.0.s8 %v1828
    %v1830 = vlaneseq
    %v1831 = vshrl.u32 %v1830, 7
    %v1832 = vsub.s32 %v1829, %v1831
    %v1833 = vrot.slane %v1819, %v1832
    %v1834 = vcombine.low %v1810, %v1826
    %v1835 = vcombine.high %v1810, %v1826
    %v1837 = vunpack.c.l.s4 1934713408
    %v1838 = vunpack.c.0.s8 %v1837
    %v1839 = vlaneseq
    %v1840 = vshrl.u32 %v1839, 7
    %v1841 = vsub.s32 %v1838, %v1840
    %v1842 = vrot.slane %v1834, %v1841
    %v1844 = vunpack.c.l.s4 1934713408
    %v1845 = vunpack.c.0.s8 %v1844
    %v1846 = vlaneseq
    %v1847 = vshrl.u32 %v1846, 7
    %v1848 = vsub.s32 %v1845, %v1847
    %v1849 = vrot.slane %v1835, %v1848
    %v1850 = vcombine.low %v1817, %v1833
    %v1851 = vcombine.high %v1817, %v1833
    %v1853 = vunpack.c.l.s4 1934713408
    %v1854 = vunpack.c.0.s8 %v1853
    %v1855 = vlaneseq
    %v1856 = vshrl.u32 %v1855, 7
    %v1857 = vsub.s32 %v1854, %v1856
    %v1858 = vrot.slane %v1850, %v1857
    %v1860 = vunpack.c.l.s4 1934713408
    %v1861 = vunpack.c.0.s8 %v1860
    %v1862 = vlaneseq
    %v1863 = vshrl.u32 %v1862, 7
    %v1864 = vsub.s32 %v1861, %v1863
    %v1865 = vrot.slane %v1851, %v1864
    %v1866 = vcombine.high %v1842, 0.0
    %v1867 = vcombine.high %v1849, 0.0
    %v1868 = vcombine.high %v1858, 0.0
    %v1869 = vcombine.high %v1865, 0.0
    %v1870 = vcombine.low %v1556, %v1718
    %v1871 = vcombine.high %v1556, %v1718
    %v1873 = vunpack.c.l.s4 1983009808
    %v1874 = vunpack.c.0.s8 %v1873
    %v1875 = vlaneseq
    %v1876 = vshrl.u32 %v1875, 7
    %v1877 = vsub.s32 %v1874, %v1876
    %v1878 = vrot.slane %v1870, %v1877
    %v1880 = vunpack.c.l.s4 1983009808
    %v1881 = vunpack.c.0.s8 %v1880
    %v1882 = vlaneseq
    %v1883 = vshrl.u32 %v1882, 7
    %v1884 = vsub.s32 %v1881, %v1883
    %v1885 = vrot.slane %v1871, %v1884
    %v1886 = vcombine.low %v1637, %v1799
    %v1887 = vcombine.high %v1637, %v1799
    %v1889 = vunpack.c.l.s4 1983009808
    %v1890 = vunpack.c.0.s8 %v1889
    %v1891 = vlaneseq
    %v1892 = vshrl.u32 %v1891, 7
    %v1893 = vsub.s32 %v1890, %v1892
    %v1894 = vrot.slane %v1886, %v1893
    %v1896 = vunpack.c.l.s4 1983009808
    %v1897 = vunpack.c.0.s8 %v1896
    %v1898 = vlaneseq
    %v1899 = vshrl.u32 %v1898, 7
    %v1900 = vsub.s32 %v1897, %v1899
    %v1901 = vrot.slane %v1887, %v1900
    %v1902 = vcombine.low %v1878, %v1894
    %v1903 = vcombine.high %v1878, %v1894
    %v1905 = vunpack.c.l.s4 1934713408
    %v1906 = vunpack.c.0.s8 %v1905
    %v1907 = vlaneseq
    %v1908 = vshrl.u32 %v1907, 7
    %v1909 = vsub.s32 %v1906, %v1908
    %v1910 = vrot.slane %v1902, %v1909
    %v1912 = vunpack.c.l.s4 1934713408
    %v1913 = vunpack.c.0.s8 %v1912
    %v1914 = vlaneseq
    %v1915 = vshrl.u32 %v1914, 7
    %v1916 = vsub.s32 %v1913, %v1915
    %v1917 = vrot.slane %v1903, %v1916
    %v1918 = vcombine.low %v1885, %v1901
    %v1919 = vcombine.high %v1885, %v1901
    %v1921 = vunpack.c.l.s4 1934713408
    %v1922 = vunpack.c.0.s8 %v1921
    %v1923 = vlaneseq
    %v1924 = vshrl.u32 %v1923, 7
    %v1925 = vsub.s32 %v1922, %v1924
    %v1926 = vrot.slane %v1918, %v1925
    %v1928 = vunpack.c.l.s4 1934713408
    %v1929 = vunpack.c.0.s8 %v1928
    %v1930 = vlaneseq
    %v1931 = vshrl.u32 %v1930, 7
    %v1932 = vsub.s32 %v1929, %v1931
    %v1933 = vrot.slane %v1919, %v1932
    %v1934 = vcombine.high %v1910, 0.0
    %v1935 = vcombine.high %v1917, 0.0
    %v1936 = vcombine.high %v1926, 0.0
    %v1937 = vcombine.high %v1933, 0.0
    %v1938 = vcombine.low %v1842, %v1849
    %v1940 = vunpack.c.l.s4 1983009808
    %v1941 = vunpack.c.0.s8 %v1940
    %v1942 = vlaneseq
    %v1943 = vshrl.u32 %v1942, 7
    %v1944 = vsub.s32 %v1941, %v1943
    %v1945 = vrot.slane %v1938, %v1944
    %v1946 = vcombine.low %v1866, %v1867
    %v1948 = vunpack.c.l.s4 1983009808
    %v1949 = vunpack.c.0.s8 %v1948
    %v1950 = vlaneseq
    %v1951 = vshrl.u32 %v1950, 7
    %v1952 = vsub.s32 %v1949, %v1951
    %v1953 = vrot.slane %v1946, %v1952
    %v1954 = vcombine.low %v1858, %v1865
    %v1956 = vunpack.c.l.s4 1983009808
    %v1957 = vunpack.c.0.s8 %v1956
    %v1958 = vlaneseq
    %v1959 = vshrl.u32 %v1958, 7
    %v1960 = vsub.s32 %v1957, %v1959
    %v1961 = vrot.slane %v1954, %v1960
    %v1962 = vcombine.low %v1868, %v1869
    %v1964 = vunpack.c.l.s4 1983009808
    %v1965 = vunpack.c.0.s8 %v1964
    %v1966 = vlaneseq
    %v1967 = vshrl.u32 %v1966, 7
    %v1968 = vsub.s32 %v1965, %v1967
    %v1969 = vrot.slane %v1962, %v1968
    %v1970 = vcombine.low %v1945, %v1953
    %v1971 = vcombine.high %v1945, %v1953
    %v1973 = vunpack.c.l.s4 1934713408
    %v1974 = vunpack.c.0.s8 %v1973
    %v1975 = vlaneseq
    %v1976 = vshrl.u32 %v1975, 7
    %v1977 = vsub.s32 %v1974, %v1976
    %v1978 = vrot.slane %v1970, %v1977
    %v1980 = vunpack.c.l.s4 1934713408
    %v1981 = vunpack.c.0.s8 %v1980
    %v1982 = vlaneseq
    %v1983 = vshrl.u32 %v1982, 7
    %v1984 = vsub.s32 %v1981, %v1983
    %v1985 = vrot.slane %v1971, %v1984
    %v1986 = vcombine.low %v1961, %v1969
    %v1987 = vcombine.high %v1961, %v1969
    %v1989 = vunpack.c.l.s4 1934713408
    %v1990 = vunpack.c.0.s8 %v1989
    %v1991 = vlaneseq
    %v1992 = vshrl.u32 %v1991, 7
    %v1993 = vsub.s32 %v1990, %v1992
    %v1994 = vrot.slane %v1986, %v1993
    %v1996 = vunpack.c.l.s4 1934713408
    %v1997 = vunpack.c.0.s8 %v1996
    %v1998 = vlaneseq
    %v1999 = vshrl.u32 %v1998, 7
    %v2000 = vsub.s32 %v1997, %v1999
    %v2001 = vrot.slane %v1987, %v2000
    %v2002 = vcombine.low %v1978, %v1994
    %v2003 = vcombine.high %v1978, %v1994
    %v2004 = vcombine.low %v1985, %v2001
    %v2005 = vcombine.high %v1985, %v2001
    %v2006 = vcombine.low %v1910, %v1917
    %v2008 = vunpack.c.l.s4 1983009808
    %v2009 = vunpack.c.0.s8 %v2008
    %v2010 = vlaneseq
    %v2011 = vshrl.u32 %v2010, 7
    %v2012 = vsub.s32 %v2009, %v2011
    %v2013 = vrot.slane %v2006, %v2012
    %v2014 = vcombine.low %v1934, %v1935
    %v2016 = vunpack.c.l.s4 1983009808
    %v2017 = vunpack.c.0.s8 %v2016
    %v2018 = vlaneseq
    %v2019 = vshrl.u32 %v2018, 7
    %v2020 = vsub.s32 %v2017, %v2019
    %v2021 = vrot.slane %v2014, %v2020
    %v2022 = vcombine.low %v1926, %v1933
    %v2024 = vunpack.c.l.s4 1983009808
    %v2025 = vunpack.c.0.s8 %v2024
    %v2026 = vlaneseq
    %v2027 = vshrl.u32 %v2026, 7
    %v2028 = vsub.s32 %v2025, %v2027
    %v2029 = vrot.slane %v2022, %v2028
    %v2030 = vcombine.low %v1936, %v1937
    %v2032 = vunpack.c.l.s4 1983009808
    %v2033 = vunpack.c.0.s8 %v2032
    %v2034 = vlaneseq
    %v2035 = vshrl.u32 %v2034, 7
    %v2036 = vsub.s32 %v2033, %v2035
    %v2037 = vrot.slane %v2030, %v2036
    %v2038 = vcombine.low %v2013, %v2021
    %v2039 = vcombine.high %v2013, %v2021
    %v2041 = vunpack.c.l.s4 1934713408
    %v2042 = vunpack.c.0.s8 %v2041
    %v2043 = vlaneseq
    %v2044 = vshrl.u32 %v2043, 7
    %v2045 = vsub.s32 %v2042, %v2044
    %v2046 = vrot.slane %v2038, %v2045
    %v2048 = vunpack.c.l.s4 1934713408
    %v2049 = vunpack.c.0.s8 %v2048
    %v2050 = vlaneseq
    %v2051 = vshrl.u32 %v2050, 7
    %v2052 = vsub.s32 %v2049, %v2051
    %v2053 = vrot.slane %v2039, %v2052
    %v2054 = vcombine.low %v2029, %v2037
    %v2055 = vcombine.high %v2029, %v2037
    %v2057 = vunpack.c.l.s4 1934713408
    %v2058 = vunpack.c.0.s8 %v2057
    %v2059 = vlaneseq
    %v2060 = vshrl.u32 %v2059, 7
    %v2061 = vsub.s32 %v2058, %v2060
    %v2062 = vrot.slane %v2054, %v2061
    %v2064 = vunpack.c.l.s4 1934713408
    %v2065 = vunpack.c.0.s8 %v2064
    %v2066 = vlaneseq
    %v2067 = vshrl.u32 %v2066, 7
    %v2068 = vsub.s32 %v2065, %v2067
    %v2069 = vrot.slane %v2055, %v2068
    %v2070 = vcombine.low %v2046, %v2062
    %v2071 = vcombine.high %v2046, %v2062
    %v2072 = vcombine.low %v2053, %v2069
    %v2073 = vcombine.high %v2053, %v2069
    %2076 = vrot.lane.b32.xlu0 %v2003, 8
    %v2077 = vpop.permute.xlu0 %2076
    %2078 = vrot.lane.b32.xlu0 %v2071, 8
    %v2079 = vpop.permute.xlu0 %2078
    %2084 = vrot.lane.b32.xlu0 %v2004, 16
    %v2085 = vpop.permute.xlu0 %2084
    %2086 = vrot.lane.b32.xlu0 %v2072, 16
    %v2087 = vpop.permute.xlu0 %2086
    %2092 = vrot.lane.b32.xlu0 %v2005, 24
    %v2093 = vpop.permute.xlu0 %2092
    %2094 = vrot.lane.b32.xlu0 %v2073, 24
    %v2095 = vpop.permute.xlu0 %2094
    %v2098 = vsel %vm1040, %v2002, %v2077
    %v2099 = vsel %vm1040, %v2070, %v2079
    %v2100 = vsel %vm1389, %v2098, %v2085
    %v2101 = vsel %vm1389, %v2099, %v2087
    %vm2102 = vcmask 195584
    %v2103 = vsel %vm2102, %v2100, %v2093
    %v2104 = vsel %vm2102, %v2101, %v2095
    %2105 = vrot.lane.b32.xlu0 %v136, 32
    %v2106 = vpop.permute.xlu0 %2105
    %2107 = vrot.lane.b32.xlu0 %v141, 32
    %v2108 = vpop.permute.xlu0 %2107
    %v2111 = vadd.f32 %v2103, %v2106
    %v2112 = vadd.f32 %v2104, %v2108
    %v2113 = vmax.f32 %v2111, 0.0
    %v2114 = vmax.f32 %v2112, 0.0
    %v2115 = vsel %vm62, %v2113, 0.0
    %2116 = vadd.xlane.f32.xlu0 %v2115
    %v2117 = vpop.xlane.xlu0 %2116
    %v2118 = vsel %vm62, %v2114, 0.0
    %2119 = vadd.xlane.f32.xlu0 %v2118
    %v2120 = vpop.xlane.xlu0 %2119
    %v2121 = vrcp.pop 32.0
    %v2122 = vmul.f32 %v2117, %v2121
    %v2123 = vmul.f32 %v2120, %v2121
    %v2124 = vsub.f32 %v2113, %v2122
    %v2125 = vsub.f32 %v2114, %v2123
    %v2126 = vmul.f32 %v2124, %v2124
    %v2127 = vmul.f32 %v2125, %v2125
    %v2128 = vsel %vm62, %v2126, 0.0
    %2129 = vadd.xlane.f32.xlu0 %v2128
    %v2130 = vpop.xlane.xlu0 %2129
    %v2131 = vsel %vm62, %v2127, 0.0
    %2132 = vadd.xlane.f32.xlu0 %v2131
    %v2133 = vpop.xlane.xlu0 %2132
    %v2134 = vmul.f32 %v2130, %v2121
    %v2135 = vmul.f32 %v2133, %v2121
    %v2136 = vadd.f32 %v2134, 1e-12
    %v2137 = vadd.f32 %v2135, 1e-12
    %v2138 = vrsqrt.pop %v2136
    %v2139 = vrsqrt.pop %v2137
    %v2140 = vmul.f32 %v2124, %v2138
    %v2141 = vmul.f32 %v2125, %v2139
    %v2142 = vld [vmem:[%s3] sm:$0x1]
    %v2144 = vlaneseq
    %v2145 = vshrl.u32 %v2144, 7
    %v2146 = vsub.s32 0, %v2145
    %v2147 = vrot.slane %v2142, %v2146
    %v2149 = vmul.f32 %v2140, %v2147
    %v2150 = vmul.f32 %v2141, %v2147
    %v2151 = vld [vmem:[%s4] sm:$0x1]
    %v2153 = vlaneseq
    %v2154 = vshrl.u32 %v2153, 7
    %v2155 = vsub.s32 0, %v2154
    %v2156 = vrot.slane %v2151, %v2155
    %v2158 = vadd.f32 %v2149, %v2156
    %v2159 = vadd.f32 %v2150, %v2156
    %2160 = vst.msk [vmem:[#allocation7] sm:$0xff] %vm62, %v2158
    %2161 = vst.msk [vmem:[#allocation7 + $0x8] sm:$0xff] %vm62, %v2159
    // Predicated region
    $region30: #{tpu_custom_call.1} parent=1 // pred_check
      _
    $region31: #{tpu_custom_call.1} parent=1 // pred_check_branch
      %2163 = sbr.rel (0) target = $region33
    $region32: #{tpu_custom_call.1} parent=1 // pred_region
      %s2165 = ssub.s32 256, 256
      %2166 = vsyncadd [#allocation4], %s2165
      %s2167 = sshll.u32 [#allocation7], 4
      %s2168 = int_to_ptr.vmem [resolvable:$true] %s2167
      %2173 = dma.vmem_to_hbm [thread:$0]  %s2168, 256, %s5, [#allocation4], 128, 128, 8
    $region33: #{tpu_custom_call.1} parent=1 // pred_fallthru
      _
    // Predicated region
    $region34: #{tpu_custom_call.1} parent=1 // pred_check
      _
    $region35: #{tpu_custom_call.1} parent=1 // pred_check_branch
      %2175 = sbr.rel (0) target = $region37
    $region36: #{tpu_custom_call.1} parent=1 // pred_region
      %2176 = dma.done [#allocation4], 256
    $region37: #{tpu_custom_call.1} parent=1 // pred_fallthru
      _
    %2177 = vsyncpa [#allocation3], 1
    %2178 = vsyncpa [#allocation6], 1
    %2179 = vsyncpa [#allocation4], 1

</llo_original>
